<compile_context>
chip_gen: v7x
topology: tpu7x:2x2x1
jax: 0.10.0
libtpu: 0.0.40
codegen_flags: <defaults>
</compile_context>

<pallas_src>
import functools
import math

import jax
import jax.numpy as jnp
from jax import lax
from jax.experimental import pallas as pl
from jax.experimental.pallas import tpu as pltpu

LANE = 128
_MIB = 1024 * 1024


def _round_up(v, m):
    return ((v + m - 1) // m) * m


def _pad2d(a, rows, cols):
    return jnp.pad(a, ((0, rows - a.shape[0]), (0, cols - a.shape[1])))


def _vmem_capacity_bytes():
    """Physical per-core VMEM; falls back to the smallest gen (v7x, 64 MiB)."""
    try:
        info = pltpu.get_tpu_info()
        for attr in ("vmem_capacity_bytes", "vmem_size_bytes", "vmem_bytes"):
            v = getattr(info, attr, None)
            if v:
                return int(v)
    except Exception:
        pass
    return 64 * _MIB


def _fgcn_kernel(x_ref, adj0t_ref, adj1_ref, w1_ref, w2_ref, out_ref, acc_ref,
                 *, nclass, layer1_xw_first, layer2_adj_first):
    k = pl.program_id(0)
    cdt = x_ref.dtype                       # matmul operand dtype (bf16 or f32)
    # Contract dim 0 of both operands: adj0t tile (tk, n1_p) is adj0 tile^T, so
    # this computes adj0_tile @ rhs with a contiguous-in-HBM streamed layout.
    dn_t = (((0,), (0,)), ((), ()))

    @pl.when(k == 0)
    def _init():
        acc_ref[...] = jnp.zeros_like(acc_ref)

    # ---- layer 1: partial reduction over this n0 tile ----
    if layer1_xw_first:
        # acc (n1_p, nhid_p) += adj0_tile @ (x_tile @ w1)
        support = jnp.dot(x_ref[...], w1_ref[...], preferred_element_type=cdt)
        acc_ref[...] += lax.dot_general(adj0t_ref[...], support,
                                        dimension_numbers=dn_t,
                                        preferred_element_type=jnp.float32)
    else:
        # acc (n1_p, nfeat_p) += adj0_tile @ x_tile   (w1 applied at finalize)
        acc_ref[...] += lax.dot_general(adj0t_ref[...], x_ref[...],
                                        dimension_numbers=dn_t,
                                        preferred_element_type=jnp.float32)

    # ---- finalize: relu + layer 2 + log_softmax, once, on the last step ----
    @pl.when(k == pl.num_programs(0) - 1)
    def _finalize():
        if layer1_xw_first:
            h1 = jnp.maximum(acc_ref[...], 0.0).astype(cdt)        # F.relu
        else:
            pre = jnp.dot(acc_ref[...].astype(cdt), w1_ref[...],
                          preferred_element_type=jnp.float32)
            h1 = jnp.maximum(pre, 0.0).astype(cdt)                 # F.relu
        # F.dropout: identity in inference mode (see TODO at top of file).

        if layer2_adj_first:
            t = jnp.dot(adj1_ref[...], h1, preferred_element_type=cdt)
            logits = jnp.dot(t, w2_ref[...], preferred_element_type=jnp.float32)
        else:
            s2 = jnp.dot(h1, w2_ref[...], preferred_element_type=cdt)
            logits = jnp.dot(adj1_ref[...], s2, preferred_element_type=jnp.float32)

        # Mask padded class lanes; large *finite* negative keeps f32 math NaN-free.
        neg = jnp.float32(jnp.finfo(jnp.float32).min / 2)
        col = lax.broadcasted_iota(jnp.int32, logits.shape, 1)
        logits = jnp.where(col < nclass, logits, neg)

        # log_softmax along dim=1 (classes).
        m = jnp.max(logits, axis=1, keepdims=True)
        z = logits - m
        lse = jnp.log(jnp.sum(jnp.exp(z), axis=1, keepdims=True))
        out_ref[...] = (z - lse).astype(out_ref.dtype)


def fastgcn_forward(x, adj0, adj1, w1, w2, *, compute_dtype=jnp.bfloat16):
    n0, nfeat = x.shape
    n1 = adj0.shape[0]
    n2 = adj1.shape[0]
    nhid = w1.shape[1]
    nclass = w2.shape[1]
    assert adj0.shape == (n1, n0)
    assert adj1.shape == (n2, n1)
    assert w1.shape == (nfeat, nhid)
    assert w2.shape == (nhid, nclass)

    cdt = jnp.dtype(compute_dtype)
    itemsize = cdt.itemsize
    sub = max(8, 32 // itemsize)            # sublane pack: 8 for f32, 16 for bf16

    nfeat_p = _round_up(nfeat, LANE)        # lane of x / sublane of w1
    nhid_p = _round_up(nhid, LANE)          # lane of w1/h1, sublane of w2
    nclass_p = _round_up(nclass, LANE)      # lane of w2/out (lane-dense stores)
    n1_p = _round_up(n1, LANE)              # lane of adj0^T / adj1
    n2_p = _round_up(n2, sub)               # sublane of adj1/out (bf16-pack aware)
    n0_lane = _round_up(n0, LANE)

    # ---- explicit VMEM budget ----
    vmem_phys = _vmem_capacity_bytes()
    vmem_budget = vmem_phys - 8 * _MIB      # headroom for compiler internals

    # Resident (constant-block) inputs, sized conservatively at 2 buffers in case
    # the single-buffer request falls back to the default pipelining.
    resident_in = 2 * (n2_p * n1_p + nfeat_p * nhid_p + nhid_p * nclass_p) * itemsize
    out_bytes = n2_p * nclass_p * 4 * 2     # f32 output, default 2 buffers

    # ---- layer-1 association: padded-FLOP comparison, gated on acc footprint ----
    fl_l1_xw = 2.0 * n0_lane * nfeat_p * nhid_p + 2.0 * n1_p * n0_lane * nhid_p
    fl_l1_ax = 2.0 * n1_p * n0_lane * nfeat_p + 2.0 * n1_p * nfeat_p * nhid_p
    acc_xw = n1_p * nhid_p * 4
    acc_ax = n1_p * nfeat_p * 4
    min_stream = 2 * LANE * (nfeat_p + n1_p) * itemsize
    ax_fits = resident_in + out_bytes + acc_ax + min_stream <= vmem_budget
    layer1_xw_first = not (fl_l1_ax < fl_l1_xw and ax_fits)
    acc_bytes = acc_xw if layer1_xw_first else acc_ax
    acc_shape = (n1_p, nhid_p) if layer1_xw_first else (n1_p, nfeat_p)

    # ---- layer-2 association: padded-FLOP comparison ----
    fl_l2_adj = 2.0 * n2_p * n1_p * nhid_p + 2.0 * n2_p * nhid_p * nclass_p
    fl_l2_w = 2.0 * n1_p * nhid_p * nclass_p + 2.0 * n2_p * n1_p * nclass_p
    layer2_adj_first = fl_l2_adj <= fl_l2_w

    # ---- adaptive tk (n0 tile), sized against the VMEM budget ----
    stream_row_bytes = (nfeat_p + n1_p) * itemsize      # one n0 row of x + adj0^T
    avail = max(0, vmem_budget - resident_in - out_bytes - acc_bytes)
    tk_vmem = max(LANE, (avail // (2 * stream_row_bytes)) // LANE * LANE)
    if n0_lane >= 4 * 512:
        # big problems: >=4 reduction steps (DMA/compute overlap), tk in [512, 2048]
        tk = min(2048, _round_up((n0_lane + 3) // 4, LANE))
    else:
        tk = min(n0_lane, 512)
    tk = max(LANE, min(tk, tk_vmem))
    n0_p = _round_up(n0, tk)
    grid = (n0_p // tk,)

    # ---- pad + cast (adj0 pre-transposed -> contiguous streamed HBM tiles) ----
    x_p = _pad2d(x, n0_p, nfeat_p).astype(cdt)
    adj0t_p = _pad2d(adj0.T, n0_p, n1_p).astype(cdt)
    adj1_p = _pad2d(adj1, n2_p, n1_p).astype(cdt)
    w1_p = _pad2d(w1, nfeat_p, nhid_p).astype(cdt)
    w2_p = _pad2d(w2, nhid_p, nclass_p).astype(cdt)

    kernel = functools.partial(_fgcn_kernel, nclass=nclass,
                               layer1_xw_first=layer1_xw_first,
                               layer2_adj_first=layer2_adj_first)

    # Advisory cost for XLA's scheduler around the custom call.
    if layer1_xw_first:
        flops = 2.0 * n0_p * nfeat_p * nhid_p + 2.0 * n1_p * n0_p * nhid_p
    else:
        flops = 2.0 * n1_p * n0_p * nfeat_p + 2.0 * n1_p * nfeat_p * nhid_p
    flops += fl_l2_adj if layer2_adj_first else fl_l2_w
    bytes_accessed = sum(int(a.size) * a.dtype.itemsize
                         for a in (x_p, adj0t_p, adj1_p, w1_p, w2_p))
    bytes_accessed += n2_p * nclass_p * 4
    cost = pl.CostEstimate(flops=int(flops),
                           transcendentals=int(n2_p * nclass_p + n2_p),
                           bytes_accessed=int(bytes_accessed))

    needed = (resident_in + out_bytes + acc_bytes
              + 2 * tk * stream_row_bytes + 2 * _MIB)
    vmem_limit = int(min(vmem_phys - 2 * _MIB, max(32 * _MIB, 2 * needed)))

    def _resident_spec(shape, pm):
        if pm is None:
            return pl.BlockSpec(shape, lambda k: (0, 0))
        return pl.BlockSpec(shape, lambda k: (0, 0), pipeline_mode=pm)

    def _call(resident_pm):
        grid_spec = pltpu.PrefetchScalarGridSpec(
            num_scalar_prefetch=0,
            grid=grid,
            in_specs=[
                # streamed tiles (default double-buffered)
                pl.BlockSpec((tk, nfeat_p), lambda k: (k, 0)),   # x tile
                pl.BlockSpec((tk, n1_p), lambda k: (k, 0)),      # adj0^T tile (contiguous)
                # residents (constant block index)
                _resident_spec((n2_p, n1_p), resident_pm),       # adj1
                _resident_spec((nfeat_p, nhid_p), resident_pm),  # w1
                _resident_spec((nhid_p, nclass_p), resident_pm), # w2
            ],
            out_specs=pl.BlockSpec((n2_p, nclass_p), lambda k: (0, 0)),
            scratch_shapes=[pltpu.VMEM(acc_shape, jnp.float32)],  # layer-1 accumulator
        )
        return pl.pallas_call(
            kernel,
            out_shape=jax.ShapeDtypeStruct((n2_p, nclass_p), jnp.float32),
            grid_spec=grid_spec,
            compiler_params=pltpu.CompilerParams(
                dimension_semantics=("arbitrary",),   # n0 axis is a reduction
                vmem_limit_bytes=vmem_limit,
            ),
            cost_estimate=cost,
        )(x_p, adj0t_p, adj1_p, w1_p, w2_p)

    buffered = getattr(pl, "Buffered", None)
    try:
        # Single-buffer the constant-index residents (halves their VMEM cost).
        out_p = _call(buffered(1) if buffered is not None else None)
    except Exception:
        # Fallback: default buffering if this jax version rejects Buffered(1).
        out_p = _call(None)

    return out_p[:n2, :nclass]


def _reference(x, adj0, adj1, w1, w2):
    h1 = jnp.maximum(adj0 @ (x @ w1), 0.0)
    logits = adj1 @ (h1 @ w2)
    return jax.nn.log_softmax(logits, axis=1)


if __name__ == "__main__":
    # Small FastGCN-style problem sizes.
    n0, n1, n2 = 64, 32, 16          # nodes sampled at each layer
    nfeat, nhid, nclass = 32, 32, 8

    key = jax.random.PRNGKey(0)
    kx, ka0, ka1, kw1, kw2 = jax.random.split(key, 5)

    x = jax.random.normal(kx, (n0, nfeat), dtype=jnp.float32)

    # Row-normalized dense "sparse" adjacencies (spmm -> dense mm).
    adj0 = jax.random.uniform(ka0, (n1, n0), dtype=jnp.float32)
    adj0 = adj0 / jnp.sum(adj0, axis=1, keepdims=True)
    adj1 = jax.random.uniform(ka1, (n2, n1), dtype=jnp.float32)
    adj1 = adj1 / jnp.sum(adj1, axis=1, keepdims=True)

    # Deterministic init matching GraphConvolution.reset_parameters:
    # uniform(-stdv, stdv) with stdv = 1/sqrt(out_features).
    stdv1 = 1.0 / math.sqrt(nhid)
    w1 = jax.random.uniform(kw1, (nfeat, nhid), dtype=jnp.float32,
                            minval=-stdv1, maxval=stdv1)
    stdv2 = 1.0 / math.sqrt(nclass)
    w2 = jax.random.uniform(kw2, (nhid, nclass), dtype=jnp.float32,
                            minval=-stdv2, maxval=stdv2)

    ref = _reference(x, adj0, adj1, w1, w2)

    # Exact-semantics check (f32 operands).
    out_f32 = jax.block_until_ready(
        fastgcn_forward(x, adj0, adj1, w1, w2, compute_dtype=jnp.float32))
    assert out_f32.shape == (n2, nclass)
    assert jnp.allclose(out_f32, ref, atol=1e-4, rtol=1e-4), "f32 mismatch vs reference"

    # Default fast path: bf16 operands, f32 accumulation.
    out_bf16 = jax.block_until_ready(fastgcn_forward(x, adj0, adj1, w1, w2))
    assert out_bf16.shape == (n2, nclass)
    assert jnp.allclose(out_bf16, ref, atol=5e-2, rtol=5e-2), "bf16 mismatch vs reference"

    print("KERNEL_OK")
</pallas_src>

<mosaic_0001>
module attributes {stable_mosaic.version = 11 : i64} {
  func.func @_fgcn_kernel(%arg0: i32, %arg1: memref<128x128xf32, #tpu.memory_space<vmem>>, %arg2: memref<128x128xf32, #tpu.memory_space<vmem>>, %arg3: memref<16x128xf32, #tpu.memory_space<vmem>>, %arg4: memref<128x128xf32, #tpu.memory_space<vmem>>, %arg5: memref<128x128xf32, #tpu.memory_space<vmem>>, %arg6: memref<16x128xf32, #tpu.memory_space<vmem>>, %arg7: memref<128x128xf32, #tpu.memory_space<vmem>>) attributes {dimension_semantics = [#tpu.dimension_semantics<arbitrary>], iteration_bounds = array<i64: 1>, scalar_prefetch = 0 : i64, scratch_operands = 1 : i64, tpu.core_type = #tpu.core_type<tc>, window_params = [{transform_indices = @transform_0, window_bounds = array<i64: 128, 128>}, {transform_indices = @transform_1, window_bounds = array<i64: 128, 128>}, {pipeline_mode = #tpu.pipeline_mode<synchronous>, transform_indices = @transform_2, window_bounds = array<i64: 16, 128>}, {pipeline_mode = #tpu.pipeline_mode<synchronous>, transform_indices = @transform_3, window_bounds = array<i64: 128, 128>}, {pipeline_mode = #tpu.pipeline_mode<synchronous>, transform_indices = @transform_4, window_bounds = array<i64: 128, 128>}, {pipeline_mode = #tpu.pipeline_mode<synchronous>, transform_indices = @transform_5, window_bounds = array<i64: 16, 128>}]} {
    %c0_i32 = arith.constant 0 : i32
    %0 = arith.cmpi eq, %arg0, %c0_i32 : i32
    %1 = arith.extui %0 : i1 to i32
    %c0_i32_0 = arith.constant 0 : i32
    %2 = arith.cmpi ne, %1, %c0_i32_0 : i32
    scf.if %2 {
      %cst_13 = arith.constant 0.000000e+00 : f32
      %14 = vector.broadcast %cst_13 : f32 to vector<128x128xf32>
      %c0_14 = arith.constant 0 : index
      %c0_15 = arith.constant 0 : index
      %15 = vector.load %arg7[%c0_14, %c0_15] : memref<128x128xf32, #tpu.memory_space<vmem>>, vector<128x128xf32>
      tpu.vector_store %arg7[%c0_14, %c0_15], %14 {strides = array<i32>} : memref<128x128xf32, #tpu.memory_space<vmem>>, vector<128x128xf32>,
    } else {
    }
    %c0 = arith.constant 0 : index
    %c0_1 = arith.constant 0 : index
    %3 = vector.load %arg1[%c0, %c0_1] : memref<128x128xf32, #tpu.memory_space<vmem>>, vector<128x128xf32>
    %c0_2 = arith.constant 0 : index
    %c0_3 = arith.constant 0 : index
    %4 = vector.load %arg4[%c0_2, %c0_3] : memref<128x128xf32, #tpu.memory_space<vmem>>, vector<128x128xf32>
    %cst = arith.constant dense<0.000000e+00> : vector<128x128xf32>
    %5 = tpu.matmul %3, %4, %cst {dimension_numbers = #tpu.dot_dimension_numbers<[1], [0], [0], [1], [0, 0, 1, 1], [], []>} : vector<128x128xf32>, vector<128x128xf32>, vector<128x128xf32> -> vector<128x128xf32>
    %c0_4 = arith.constant 0 : index
    %c0_5 = arith.constant 0 : index
    %6 = vector.load %arg7[%c0_4, %c0_5] : memref<128x128xf32, #tpu.memory_space<vmem>>, vector<128x128xf32>
    %c0_6 = arith.constant 0 : index
    %c0_7 = arith.constant 0 : index
    %7 = vector.load %arg2[%c0_6, %c0_7] : memref<128x128xf32, #tpu.memory_space<vmem>>, vector<128x128xf32>
    %cst_8 = arith.constant dense<0.000000e+00> : vector<128x128xf32>
    %8 = tpu.matmul %7, %5, %cst_8 {dimension_numbers = #tpu.dot_dimension_numbers<[0], [0], [1], [1], [0, 1, 1, 1], [], []>} : vector<128x128xf32>, vector<128x128xf32>, vector<128x128xf32> -> vector<128x128xf32>
    %9 = arith.addf %6, %8 : vector<128x128xf32>
    %c0_9 = arith.constant 0 : index
    %c0_10 = arith.constant 0 : index
    %10 = vector.load %arg7[%c0_9, %c0_10] : memref<128x128xf32, #tpu.memory_space<vmem>>, vector<128x128xf32>
    tpu.vector_store %arg7[%c0_9, %c0_10], %9 {strides = array<i32>} : memref<128x128xf32, #tpu.memory_space<vmem>>, vector<128x128xf32>,
    %c0_i32_11 = arith.constant 0 : i32
    %11 = arith.cmpi eq, %arg0, %c0_i32_11 : i32
    %12 = arith.extui %11 : i1 to i32
    %c0_i32_12 = arith.constant 0 : i32
    %13 = arith.cmpi ne, %12, %c0_i32_12 : i32
    scf.if %13 {
      %c0_13 = arith.constant 0 : index
      %c0_14 = arith.constant 0 : index
      %14 = vector.load %arg7[%c0_13, %c0_14] : memref<128x128xf32, #tpu.memory_space<vmem>>, vector<128x128xf32>
      %cst_15 = arith.constant 0.000000e+00 : f32
      %15 = vector.broadcast %cst_15 : f32 to vector<128x128xf32>
      %16 = arith.maximumf %14, %15 : vector<128x128xf32>
      %c0_16 = arith.constant 0 : index
      %c0_17 = arith.constant 0 : index
      %17 = vector.load %arg3[%c0_16, %c0_17] : memref<16x128xf32, #tpu.memory_space<vmem>>, vector<16x128xf32>
      %cst_18 = arith.constant dense<0.000000e+00> : vector<16x128xf32>
      %18 = tpu.matmul %17, %16, %cst_18 {dimension_numbers = #tpu.dot_dimension_numbers<[1], [0], [0], [1], [0, 0, 1, 1], [], []>} : vector<16x128xf32>, vector<128x128xf32>, vector<16x128xf32> -> vector<16x128xf32>
      %c0_19 = arith.constant 0 : index
      %c0_20 = arith.constant 0 : index
      %19 = vector.load %arg5[%c0_19, %c0_20] : memref<128x128xf32, #tpu.memory_space<vmem>>, vector<128x128xf32>
      %cst_21 = arith.constant dense<0.000000e+00> : vector<16x128xf32>
      %20 = tpu.matmul %18, %19, %cst_21 {dimension_numbers = #tpu.dot_dimension_numbers<[1], [0], [0], [1], [0, 0, 1, 1], [], []>} : vector<16x128xf32>, vector<128x128xf32>, vector<16x128xf32> -> vector<16x128xf32>
      %21 = tpu.iota {dimensions = array<i32: 1>} : vector<16x128xi32>
      %c8_i32 = arith.constant 8 : i32
      %22 = vector.broadcast %c8_i32 : i32 to vector<16x128xi32>
      %23 = arith.cmpi slt, %21, %22 : vector<16x128xi32>
      %cst_22 = arith.constant -1.70141173E+38 : f32
      %24 = vector.broadcast %cst_22 : f32 to vector<16x128xf32>
      %25 = arith.select %23, %20, %24 : vector<16x128xi1>, vector<16x128xf32>
      %cst_23 = arith.constant dense<0xFF800000> : vector<16xf32>
      %26 = vector.multi_reduction <maximumf>, %25, %cst_23 [1] : vector<16x128xf32> to vector<16xf32>
      %27 = vector.shape_cast %26 : vector<16xf32> to vector<16x1xf32>
      %28 = vector.broadcast %27 : vector<16x1xf32> to vector<16x128xf32>
      %29 = arith.subf %25, %28 : vector<16x128xf32>
      %30 = math.exp %29 : vector<16x128xf32>
      %cst_24 = arith.constant dense<0.000000e+00> : vector<16xf32>
      %31 = vector.multi_reduction <add>, %30, %cst_24 [1] : vector<16x128xf32> to vector<16xf32>
      %32 = vector.shape_cast %31 : vector<16xf32> to vector<16x1xf32>
      %33 = math.log %32 : vector<16x1xf32>
      %34 = vector.broadcast %33 : vector<16x1xf32> to vector<16x128xf32>
      %35 = arith.subf %29, %34 : vector<16x128xf32>
      %c0_25 = arith.constant 0 : index
      %c0_26 = arith.constant 0 : index
      %36 = vector.load %arg6[%c0_25, %c0_26] : memref<16x128xf32, #tpu.memory_space<vmem>>, vector<16x128xf32>
      tpu.vector_store %arg6[%c0_25, %c0_26], %35 {strides = array<i32>} : memref<16x128xf32, #tpu.memory_space<vmem>>, vector<16x128xf32>,
    } else {
    }
    return
  }
  func.func @transform_0(%arg0: i32) -> (i32, i32) {
    %c0_i32 = arith.constant 0 : i32
    %c0_i32_0 = arith.constant 0 : i32
    return %arg0, %c0_i32 : i32, i32
  }
  func.func @transform_1(%arg0: i32) -> (i32, i32) {
    %c0_i32 = arith.constant 0 : i32
    %c0_i32_0 = arith.constant 0 : i32
    return %arg0, %c0_i32 : i32, i32
  }
  func.func @transform_2(%arg0: i32) -> (i32, i32) {
    %c0_i32 = arith.constant 0 : i32
    %c0_i32_0 = arith.constant 0 : i32
    %c0_i32_1 = arith.constant 0 : i32
    return %c0_i32, %c0_i32_0 : i32, i32
  }
  func.func @transform_3(%arg0: i32) -> (i32, i32) {
    %c0_i32 = arith.constant 0 : i32
    %c0_i32_0 = arith.constant 0 : i32
    %c0_i32_1 = arith.constant 0 : i32
    return %c0_i32, %c0_i32_0 : i32, i32
  }
  func.func @transform_4(%arg0: i32) -> (i32, i32) {
    %c0_i32 = arith.constant 0 : i32
    %c0_i32_0 = arith.constant 0 : i32
    %c0_i32_1 = arith.constant 0 : i32
    return %c0_i32, %c0_i32_0 : i32, i32
  }
  func.func @transform_5(%arg0: i32) -> (i32, i32) {
    %c0_i32 = arith.constant 0 : i32
    %c0_i32_0 = arith.constant 0 : i32
    %c0_i32_1 = arith.constant 0 : i32
    return %c0_i32, %c0_i32_0 : i32, i32
  }
}

module attributes {stable_mosaic.version = 11 : i64} {
  func.func @_fgcn_kernel(%arg0: i32, %arg1: memref<128x128xf32, #tpu.memory_space<vmem>>, %arg2: memref<128x128xf32, #tpu.memory_space<vmem>>, %arg3: memref<16x128xf32, #tpu.memory_space<vmem>>, %arg4: memref<128x128xf32, #tpu.memory_space<vmem>>, %arg5: memref<128x128xf32, #tpu.memory_space<vmem>>, %arg6: memref<16x128xf32, #tpu.memory_space<vmem>>, %arg7: memref<128x128xf32, #tpu.memory_space<vmem>>) attributes {dimension_semantics = [#tpu.dimension_semantics<arbitrary>], iteration_bounds = array<i64: 1>, scalar_prefetch = 0 : i64, scratch_operands = 1 : i64, tpu.core_type = #tpu.core_type<tc>, window_params = [{transform_indices = @transform_0, window_bounds = array<i64: 128, 128>}, {transform_indices = @transform_1, window_bounds = array<i64: 128, 128>}, {pipeline_mode = #tpu.pipeline_mode<synchronous>, transform_indices = @transform_2, window_bounds = array<i64: 16, 128>}, {pipeline_mode = #tpu.pipeline_mode<synchronous>, transform_indices = @transform_3, window_bounds = array<i64: 128, 128>}, {pipeline_mode = #tpu.pipeline_mode<synchronous>, transform_indices = @transform_4, window_bounds = array<i64: 128, 128>}, {pipeline_mode = #tpu.pipeline_mode<synchronous>, transform_indices = @transform_5, window_bounds = array<i64: 16, 128>}]} {
    %c0_i32 = arith.constant 0 : i32
    %0 = arith.cmpi eq, %arg0, %c0_i32 : i32
    %1 = arith.extui %0 : i1 to i32
    %c0_i32_0 = arith.constant 0 : i32
    %2 = arith.cmpi ne, %1, %c0_i32_0 : i32
    scf.if %2 {
      %cst_13 = arith.constant 0.000000e+00 : f32
      %14 = vector.broadcast %cst_13 : f32 to vector<128x128xf32>
      %c0_14 = arith.constant 0 : index
      %c0_15 = arith.constant 0 : index
      %15 = vector.load %arg7[%c0_14, %c0_15] : memref<128x128xf32, #tpu.memory_space<vmem>>, vector<128x128xf32>
      tpu.vector_store %arg7[%c0_14, %c0_15], %14 {strides = array<i32>} : memref<128x128xf32, #tpu.memory_space<vmem>>, vector<128x128xf32>,
    } else {
    }
    %c0 = arith.constant 0 : index
    %c0_1 = arith.constant 0 : index
    %3 = vector.load %arg1[%c0, %c0_1] : memref<128x128xf32, #tpu.memory_space<vmem>>, vector<128x128xf32>
    %c0_2 = arith.constant 0 : index
    %c0_3 = arith.constant 0 : index
    %4 = vector.load %arg4[%c0_2, %c0_3] : memref<128x128xf32, #tpu.memory_space<vmem>>, vector<128x128xf32>
    %cst = arith.constant dense<0.000000e+00> : vector<128x128xf32>
    %5 = tpu.matmul %3, %4, %cst {dimension_numbers = #tpu.dot_dimension_numbers<[1], [0], [0], [1], [0, 0, 1, 1], [], []>} : vector<128x128xf32>, vector<128x128xf32>, vector<128x128xf32> -> vector<128x128xf32>
    %c0_4 = arith.constant 0 : index
    %c0_5 = arith.constant 0 : index
    %6 = vector.load %arg7[%c0_4, %c0_5] : memref<128x128xf32, #tpu.memory_space<vmem>>, vector<128x128xf32>
    %c0_6 = arith.constant 0 : index
    %c0_7 = arith.constant 0 : index
    %7 = vector.load %arg2[%c0_6, %c0_7] : memref<128x128xf32, #tpu.memory_space<vmem>>, vector<128x128xf32>
    %cst_8 = arith.constant dense<0.000000e+00> : vector<128x128xf32>
    %8 = tpu.matmul %7, %5, %cst_8 {dimension_numbers = #tpu.dot_dimension_numbers<[0], [0], [1], [1], [0, 1, 1, 1], [], []>} : vector<128x128xf32>, vector<128x128xf32>, vector<128x128xf32> -> vector<128x128xf32>
    %9 = arith.addf %6, %8 : vector<128x128xf32>
    %c0_9 = arith.constant 0 : index
    %c0_10 = arith.constant 0 : index
    %10 = vector.load %arg7[%c0_9, %c0_10] : memref<128x128xf32, #tpu.memory_space<vmem>>, vector<128x128xf32>
    tpu.vector_store %arg7[%c0_9, %c0_10], %9 {strides = array<i32>} : memref<128x128xf32, #tpu.memory_space<vmem>>, vector<128x128xf32>,
    %c0_i32_11 = arith.constant 0 : i32
    %11 = arith.cmpi eq, %arg0, %c0_i32_11 : i32
    %12 = arith.extui %11 : i1 to i32
    %c0_i32_12 = arith.constant 0 : i32
    %13 = arith.cmpi ne, %12, %c0_i32_12 : i32
    scf.if %13 {
      %c0_13 = arith.constant 0 : index
      %c0_14 = arith.constant 0 : index
      %14 = vector.load %arg7[%c0_13, %c0_14] : memref<128x128xf32, #tpu.memory_space<vmem>>, vector<128x128xf32>
      %cst_15 = arith.constant 0.000000e+00 : f32
      %15 = vector.broadcast %cst_15 : f32 to vector<128x128xf32>
      %16 = arith.maximumf %14, %15 : vector<128x128xf32>
      %c0_16 = arith.constant 0 : index
      %c0_17 = arith.constant 0 : index
      %17 = vector.load %arg3[%c0_16, %c0_17] : memref<16x128xf32, #tpu.memory_space<vmem>>, vector<16x128xf32>
      %cst_18 = arith.constant dense<0.000000e+00> : vector<16x128xf32>
      %18 = tpu.matmul %17, %16, %cst_18 {dimension_numbers = #tpu.dot_dimension_numbers<[1], [0], [0], [1], [0, 0, 1, 1], [], []>} : vector<16x128xf32>, vector<128x128xf32>, vector<16x128xf32> -> vector<16x128xf32>
      %c0_19 = arith.constant 0 : index
      %c0_20 = arith.constant 0 : index
      %19 = vector.load %arg5[%c0_19, %c0_20] : memref<128x128xf32, #tpu.memory_space<vmem>>, vector<128x128xf32>
      %cst_21 = arith.constant dense<0.000000e+00> : vector<16x128xf32>
      %20 = tpu.matmul %18, %19, %cst_21 {dimension_numbers = #tpu.dot_dimension_numbers<[1], [0], [0], [1], [0, 0, 1, 1], [], []>} : vector<16x128xf32>, vector<128x128xf32>, vector<16x128xf32> -> vector<16x128xf32>
      %21 = tpu.iota {dimensions = array<i32: 1>} : vector<16x128xi32>
      %c8_i32 = arith.constant 8 : i32
      %22 = vector.broadcast %c8_i32 : i32 to vector<16x128xi32>
      %23 = arith.cmpi slt, %21, %22 : vector<16x128xi32>
      %cst_22 = arith.constant -1.70141173E+38 : f32
      %24 = vector.broadcast %cst_22 : f32 to vector<16x128xf32>
      %25 = arith.select %23, %20, %24 : vector<16x128xi1>, vector<16x128xf32>
      %cst_23 = arith.constant dense<0xFF800000> : vector<16xf32>
      %26 = vector.multi_reduction <maximumf>, %25, %cst_23 [1] : vector<16x128xf32> to vector<16xf32>
      %27 = vector.shape_cast %26 : vector<16xf32> to vector<16x1xf32>
      %28 = vector.broadcast %27 : vector<16x1xf32> to vector<16x128xf32>
      %29 = arith.subf %25, %28 : vector<16x128xf32>
      %30 = math.exp %29 : vector<16x128xf32>
      %cst_24 = arith.constant dense<0.000000e+00> : vector<16xf32>
      %31 = vector.multi_reduction <add>, %30, %cst_24 [1] : vector<16x128xf32> to vector<16xf32>
      %32 = vector.shape_cast %31 : vector<16xf32> to vector<16x1xf32>
      %33 = math.log %32 : vector<16x1xf32>
      %34 = vector.broadcast %33 : vector<16x1xf32> to vector<16x128xf32>
      %35 = arith.subf %29, %34 : vector<16x128xf32>
      %c0_25 = arith.constant 0 : index
      %c0_26 = arith.constant 0 : index
      %36 = vector.load %arg6[%c0_25, %c0_26] : memref<16x128xf32, #tpu.memory_space<vmem>>, vector<16x128xf32>
      tpu.vector_store %arg6[%c0_25, %c0_26], %35 {strides = array<i32>} : memref<16x128xf32, #tpu.memory_space<vmem>>, vector<16x128xf32>,
    } else {
    }
    return
  }
  func.func @transform_0(%arg0: i32) -> (i32, i32) {
    %c0_i32 = arith.constant 0 : i32
    %c0_i32_0 = arith.constant 0 : i32
    return %arg0, %c0_i32 : i32, i32
  }
  func.func @transform_1(%arg0: i32) -> (i32, i32) {
    %c0_i32 = arith.constant 0 : i32
    %c0_i32_0 = arith.constant 0 : i32
    return %arg0, %c0_i32 : i32, i32
  }
  func.func @transform_2(%arg0: i32) -> (i32, i32) {
    %c0_i32 = arith.constant 0 : i32
    %c0_i32_0 = arith.constant 0 : i32
    %c0_i32_1 = arith.constant 0 : i32
    return %c0_i32, %c0_i32_0 : i32, i32
  }
  func.func @transform_3(%arg0: i32) -> (i32, i32) {
    %c0_i32 = arith.constant 0 : i32
    %c0_i32_0 = arith.constant 0 : i32
    %c0_i32_1 = arith.constant 0 : i32
    return %c0_i32, %c0_i32_0 : i32, i32
  }
  func.func @transform_4(%arg0: i32) -> (i32, i32) {
    %c0_i32 = arith.constant 0 : i32
    %c0_i32_0 = arith.constant 0 : i32
    %c0_i32_1 = arith.constant 0 : i32
    return %c0_i32, %c0_i32_0 : i32, i32
  }
  func.func @transform_5(%arg0: i32) -> (i32, i32) {
    %c0_i32 = arith.constant 0 : i32
    %c0_i32_0 = arith.constant 0 : i32
    %c0_i32_1 = arith.constant 0 : i32
    return %c0_i32, %c0_i32_0 : i32, i32
  }
}

</mosaic_0001>

<llo_original>
// kernel: tpu_custom_call.1
$region0: #{tpu_custom_call.1}
  #allocation0 [shape = 'u32[]', space=smem, size = 0x4, offset = 0x4, fixed_abs, tag = 'smem constant byte address 0x4 - core index']
  #allocation1 [shape = 'u32[144,128]{1,0:T(1,128)}', space=vmem, size = 0x12000, scoped, tag = 'internal scratch']
  #allocation2 [shape = 'f32[128,128]{1,0:T(8,128)}', space=vmem, size = 0x10000, scoped, tag = 'scratch operand']
  %s0 = inlined_call_operand.hbm [shape: f32[128,128], index: 0, kind: input, shape index: {}]
  %s1 = inlined_call_operand.hbm [shape: f32[128,128], index: 1, kind: input, shape index: {}]
  %s2 = inlined_call_operand.hbm [shape: f32[16,128], index: 2, kind: input, shape index: {}]
  %s3 = inlined_call_operand.hbm [shape: f32[128,128], index: 3, kind: input, shape index: {}]
  %s4 = inlined_call_operand.hbm [shape: f32[128,128], index: 4, kind: input, shape index: {}]
  %s5 = inlined_call_operand.hbm [shape: f32[16,128], index: 5, kind: output, shape index: {}]
  %s6 = sld [smem:[#allocation0]]
  $region58: #{tpu_custom_call.1} parent=0
    _
  %s8 = ssub.s32 1, %s6
  %s9 = scalar_select 0, %s8, %s6
  $region1: #{tpu_custom_call.1} parent=0
    #allocation3 [shape = 'u8[65536]{0}', space=vmem, size = 0x10000, scoped, tag = 'input window, operand 0, single buffered']
    #allocation4 [shape = 's32[1]{0}', space=sflag, size = 0x4, scoped, tag = 'scoped memory for tpu_custom_call.1']
    #allocation5 [shape = 's32[1]{0}', space=sflag, size = 0x4, scoped, tag = 'scoped memory for tpu_custom_call.1']
    #allocation6 [shape = 'u8[65536]{0}', space=vmem, size = 0x10000, scoped, tag = 'input window, operand 1, single buffered']
    #allocation7 [shape = 's32[1]{0}', space=sflag, size = 0x4, scoped, tag = 'scoped memory for tpu_custom_call.1']
    #allocation8 [shape = 'u8[8192]{0}', space=vmem, size = 0x2000, scoped, tag = 'input window, operand 2, single buffered']
    #allocation9 [shape = 'u8[65536]{0}', space=vmem, size = 0x10000, scoped, tag = 'input window, operand 3, single buffered']
    #allocation10 [shape = 's32[1]{0}', space=sflag, size = 0x4, scoped, tag = 'scoped memory for tpu_custom_call.1']
    #allocation11 [shape = 'u8[65536]{0}', space=vmem, size = 0x10000, scoped, tag = 'input window, operand 4, single buffered']
    #allocation12 [shape = 'u8[8192]{0}', space=vmem, size = 0x2000, scoped, tag = 'output window, operand 0, single buffered']
    %10 = vsyncpa [#allocation4], 0
    %11 = vsyncpa [#allocation7], 0
    %12 = vsyncpa [#allocation10], 0
    %13 = vsyncpa [#allocation5], 0
    // Predicated region
    $region2: #{tpu_custom_call.1} parent=1 // pred_check
      _
    $region3: #{tpu_custom_call.1} parent=1 // pred_check_branch
      %15 = sbr.rel (0) target = $region5
    $region4: #{tpu_custom_call.1} parent=1 // pred_region
      %s17 = ssub.s32 2048, 2048
      %18 = vsyncadd [#allocation4], %s17
      %s19 = sshll.u32 [#allocation3], 4
      %s20 = int_to_ptr.vmem [resolvable:$true] %s19
      %25 = dma.hbm_to_vmem [thread:$0]  %s0, 2048, %s20, [#allocation4], 128, 128, 8
    $region5: #{tpu_custom_call.1} parent=1 // pred_fallthru
      _
    // Predicated region
    $region6: #{tpu_custom_call.1} parent=1 // pred_check
      _
    $region7: #{tpu_custom_call.1} parent=1 // pred_check_branch
      %27 = sbr.rel (0) target = $region9
    $region8: #{tpu_custom_call.1} parent=1 // pred_region
      %s29 = ssub.s32 2048, 2048
      %30 = vsyncadd [#allocation7], %s29
      %s31 = sshll.u32 [#allocation6], 4
      %s32 = int_to_ptr.vmem [resolvable:$true] %s31
      %37 = dma.hbm_to_vmem [thread:$0]  %s1, 2048, %s32, [#allocation7], 128, 128, 8
    $region9: #{tpu_custom_call.1} parent=1 // pred_fallthru
      _
    // Predicated region
    $region10: #{tpu_custom_call.1} parent=1 // pred_check
      _
    $region11: #{tpu_custom_call.1} parent=1 // pred_check_branch
      %39 = sbr.rel (0) target = $region13
    $region12: #{tpu_custom_call.1} parent=1 // pred_region
      %s41 = ssub.s32 256, 256
      %42 = vsyncadd [#allocation7], %s41
      %s43 = sshll.u32 [#allocation8], 4
      %s44 = int_to_ptr.vmem [resolvable:$true] %s43
      %49 = dma.hbm_to_vmem [thread:$0]  %s2, 256, %s44, [#allocation7], 128, 128, 8
    $region13: #{tpu_custom_call.1} parent=1 // pred_fallthru
      _
    // Predicated region
    $region14: #{tpu_custom_call.1} parent=1 // pred_check
      _
    $region15: #{tpu_custom_call.1} parent=1 // pred_check_branch
      %51 = sbr.rel (0) target = $region17
    $region16: #{tpu_custom_call.1} parent=1 // pred_region
      %s53 = ssub.s32 2048, 2048
      %54 = vsyncadd [#allocation10], %s53
      %s55 = sshll.u32 [#allocation9], 4
      %s56 = int_to_ptr.vmem [resolvable:$true] %s55
      %61 = dma.hbm_to_vmem [thread:$0]  %s3, 2048, %s56, [#allocation10], 128, 128, 8
    $region17: #{tpu_custom_call.1} parent=1 // pred_fallthru
      _
    // Predicated region
    $region18: #{tpu_custom_call.1} parent=1 // pred_check
      _
    $region19: #{tpu_custom_call.1} parent=1 // pred_check_branch
      %63 = sbr.rel (0) target = $region21
    $region20: #{tpu_custom_call.1} parent=1 // pred_region
      %s65 = ssub.s32 2048, 2048
      %66 = vsyncadd [#allocation10], %s65
      %s67 = sshll.u32 [#allocation11], 4
      %s68 = int_to_ptr.vmem [resolvable:$true] %s67
      %73 = dma.hbm_to_vmem [thread:$0]  %s4, 2048, %s68, [#allocation10], 128, 128, 8
    $region21: #{tpu_custom_call.1} parent=1 // pred_fallthru
      _
    // Predicated region
    $region22: #{tpu_custom_call.1} parent=1 // pred_check
      _
    $region23: #{tpu_custom_call.1} parent=1 // pred_check_branch
      %75 = sbr.rel (0) target = $region25
    $region24: #{tpu_custom_call.1} parent=1 // pred_region
      %76 = dma.done [#allocation4], 2048
    $region25: #{tpu_custom_call.1} parent=1 // pred_fallthru
      _
    // Predicated region
    $region26: #{tpu_custom_call.1} parent=1 // pred_check
      _
    $region27: #{tpu_custom_call.1} parent=1 // pred_check_branch
      %78 = sbr.rel (0) target = $region29
    $region28: #{tpu_custom_call.1} parent=1 // pred_region
      %79 = dma.done [#allocation7], 2048
    $region29: #{tpu_custom_call.1} parent=1 // pred_fallthru
      _
    // Predicated region
    $region30: #{tpu_custom_call.1} parent=1 // pred_check
      _
    $region31: #{tpu_custom_call.1} parent=1 // pred_check_branch
      %81 = sbr.rel (0) target = $region33
    $region32: #{tpu_custom_call.1} parent=1 // pred_region
      %82 = dma.done [#allocation7], 256
    $region33: #{tpu_custom_call.1} parent=1 // pred_fallthru
      _
    // Predicated region
    $region34: #{tpu_custom_call.1} parent=1 // pred_check
      _
    $region35: #{tpu_custom_call.1} parent=1 // pred_check_branch
      %84 = sbr.rel (0) target = $region37
    $region36: #{tpu_custom_call.1} parent=1 // pred_region
      %85 = dma.done [#allocation10], 2048
    $region37: #{tpu_custom_call.1} parent=1 // pred_fallthru
      _
    // Predicated region
    $region38: #{tpu_custom_call.1} parent=1 // pred_check
      _
    $region39: #{tpu_custom_call.1} parent=1 // pred_check_branch
      %87 = sbr.rel (0) target = $region41
    $region40: #{tpu_custom_call.1} parent=1 // pred_region
      %88 = dma.done [#allocation10], 2048
    $region41: #{tpu_custom_call.1} parent=1 // pred_fallthru
      _
    %p89 = scmp.eq.s32.totalorder 0, 0
    // Predicated region
    $region42: #{tpu_custom_call.1} parent=1 // pred_check
      %p90 = pneg %p89
    $region43: #{tpu_custom_call.1} parent=1 // pred_check_branch
      %92 = sbr.rel (%p90) target = $region45
    $region44: #{tpu_custom_call.1} parent=1 // pred_region
      %93 = vst [vmem:[#allocation2] sm:$0xff] 0.0
      %94 = vst [vmem:[#allocation2 + $0x8] sm:$0xff] 0.0
      %95 = vst [vmem:[#allocation2 + $0x10] sm:$0xff] 0.0
      %96 = vst [vmem:[#allocation2 + $0x18] sm:$0xff] 0.0
      %97 = vst [vmem:[#allocation2 + $0x20] sm:$0xff] 0.0
      %98 = vst [vmem:[#allocation2 + $0x28] sm:$0xff] 0.0
      %99 = vst [vmem:[#allocation2 + $0x30] sm:$0xff] 0.0
      %100 = vst [vmem:[#allocation2 + $0x38] sm:$0xff] 0.0
      %101 = vst [vmem:[#allocation2 + $0x40] sm:$0xff] 0.0
      %102 = vst [vmem:[#allocation2 + $0x48] sm:$0xff] 0.0
      %103 = vst [vmem:[#allocation2 + $0x50] sm:$0xff] 0.0
      %104 = vst [vmem:[#allocation2 + $0x58] sm:$0xff] 0.0
      %105 = vst [vmem:[#allocation2 + $0x60] sm:$0xff] 0.0
      %106 = vst [vmem:[#allocation2 + $0x68] sm:$0xff] 0.0
      %107 = vst [vmem:[#allocation2 + $0x70] sm:$0xff] 0.0
      %108 = vst [vmem:[#allocation2 + $0x78] sm:$0xff] 0.0
    $region45: #{tpu_custom_call.1} parent=1 // pred_fallthru
      _
    %v109 = vld [vmem:[#allocation3] sm:$0xff]
    %v110 = vld [vmem:[#allocation3 + $0x8] sm:$0xff]
    %v111 = vld [vmem:[#allocation3 + $0x10] sm:$0xff]
    %v112 = vld [vmem:[#allocation3 + $0x18] sm:$0xff]
    %v113 = vld [vmem:[#allocation3 + $0x20] sm:$0xff]
    %v114 = vld [vmem:[#allocation3 + $0x28] sm:$0xff]
    %v115 = vld [vmem:[#allocation3 + $0x30] sm:$0xff]
    %v116 = vld [vmem:[#allocation3 + $0x38] sm:$0xff]
    %v117 = vld [vmem:[#allocation3 + $0x40] sm:$0xff]
    %v118 = vld [vmem:[#allocation3 + $0x48] sm:$0xff]
    %v119 = vld [vmem:[#allocation3 + $0x50] sm:$0xff]
    %v120 = vld [vmem:[#allocation3 + $0x58] sm:$0xff]
    %v121 = vld [vmem:[#allocation3 + $0x60] sm:$0xff]
    %v122 = vld [vmem:[#allocation3 + $0x68] sm:$0xff]
    %v123 = vld [vmem:[#allocation3 + $0x70] sm:$0xff]
    %v124 = vld [vmem:[#allocation3 + $0x78] sm:$0xff]
    %v125 = vld [vmem:[#allocation9] sm:$0xff]
    %v126 = vld [vmem:[#allocation9 + $0x8] sm:$0xff]
    %v127 = vld [vmem:[#allocation9 + $0x10] sm:$0xff]
    %v128 = vld [vmem:[#allocation9 + $0x18] sm:$0xff]
    %v129 = vld [vmem:[#allocation9 + $0x20] sm:$0xff]
    %v130 = vld [vmem:[#allocation9 + $0x28] sm:$0xff]
    %v131 = vld [vmem:[#allocation9 + $0x30] sm:$0xff]
    %v132 = vld [vmem:[#allocation9 + $0x38] sm:$0xff]
    %v133 = vld [vmem:[#allocation9 + $0x40] sm:$0xff]
    %v134 = vld [vmem:[#allocation9 + $0x48] sm:$0xff]
    %v135 = vld [vmem:[#allocation9 + $0x50] sm:$0xff]
    %v136 = vld [vmem:[#allocation9 + $0x58] sm:$0xff]
    %v137 = vld [vmem:[#allocation9 + $0x60] sm:$0xff]
    %v138 = vld [vmem:[#allocation9 + $0x68] sm:$0xff]
    %v139 = vld [vmem:[#allocation9 + $0x70] sm:$0xff]
    %v140 = vld [vmem:[#allocation9 + $0x78] sm:$0xff]
    %141 = vmatprep.subr.mxu0 0.0
    %142 = vmatpush1.msra.mxu0 %v125
    %143 = vmatprep.subr.mxu0 0.0
    %144 = vmatpush1.msra.mxu0 %v126
    %145 = vmatprep.subr.mxu0 0.0
    %146 = vmatpush1.msra.mxu0 %v127
    %147 = vmatprep.subr.mxu0 0.0
    %148 = vmatpush1.msra.mxu0 %v128
    %149 = vmatprep.subr.mxu0 0.0
    %150 = vmatpush1.msra.mxu0 %v129
    %151 = vmatprep.subr.mxu0 0.0
    %152 = vmatpush1.msra.mxu0 %v130
    %153 = vmatprep.subr.mxu0 0.0
    %154 = vmatpush1.msra.mxu0 %v131
    %155 = vmatprep.subr.mxu0 0.0
    %156 = vmatpush1.msra.mxu0 %v132
    %157 = vmatprep.subr.mxu0 0.0
    %158 = vmatpush1.msra.mxu0 %v133
    %159 = vmatprep.subr.mxu0 0.0
    %160 = vmatpush1.msra.mxu0 %v134
    %161 = vmatprep.subr.mxu0 0.0
    %162 = vmatpush1.msra.mxu0 %v135
    %163 = vmatprep.subr.mxu0 0.0
    %164 = vmatpush1.msra.mxu0 %v136
    %165 = vmatprep.subr.mxu0 0.0
    %166 = vmatpush1.msra.mxu0 %v137
    %167 = vmatprep.subr.mxu0 0.0
    %168 = vmatpush1.msra.mxu0 %v138
    %169 = vmatprep.subr.mxu0 0.0
    %170 = vmatpush1.msra.mxu0 %v139
    %171 = vmatprep.subr.mxu0 0.0
    %172 = vmatpush1.msra.mxu0 %v140
    %173 = vmatprep.subr.mxu0 0.0
    %174 = vmatpush1.msra.mxu0 0.0
    %175 = vmatprep.subr.mxu0 0.0
    %176 = vmatpush1.msra.mxu0 0.0
    %177 = vmatprep.subr.mxu0 0.0
    %178 = vmatpush1.msra.mxu0 0.0
    %179 = vmatprep.subr.mxu0 0.0
    %180 = vmatpush1.msra.mxu0 0.0
    %181 = vmatprep.subr.mxu0 0.0
    %182 = vmatpush1.msra.mxu0 0.0
    %183 = vmatprep.subr.mxu0 0.0
    %184 = vmatpush1.msra.mxu0 0.0
    %185 = vmatprep.subr.mxu0 0.0
    %186 = vmatpush1.msra.mxu0 0.0
    %187 = vmatprep.subr.mxu0 0.0
    %188 = vmatpush1.msra.mxu0 0.0
    %189 = vmatprep.subr.mxu0 0.0
    %190 = vmatpush1.msra.mxu0 0.0
    %191 = vmatprep.subr.mxu0 0.0
    %192 = vmatpush1.msra.mxu0 0.0
    %193 = vmatprep.subr.mxu0 0.0
    %194 = vmatpush1.msra.mxu0 0.0
    %195 = vmatprep.subr.mxu0 0.0
    %196 = vmatpush1.msra.mxu0 0.0
    %197 = vmatprep.subr.mxu0 0.0
    %198 = vmatpush1.msra.mxu0 0.0
    %199 = vmatprep.subr.mxu0 0.0
    %200 = vmatpush1.msra.mxu0 0.0
    %201 = vmatprep.subr.mxu0 0.0
    %202 = vmatpush1.msra.mxu0 0.0
    %203 = vmatprep.subr.mxu0 0.0
    %204 = vmatpush1.msra.mxu0 0.0
    %205 = vmatprep.mubr.f32.mxu0 0.0
    %206 = vmatmul.mubr.f32.gmra.mrb[0].mxu0 %v109
    %v207 = vpop.f32.mrb[0].mxu0
    %v208 = vadd.f32 0.0, %v207
    %v209 = vpop.f32.mrb[0].mxu0
    %210 = vmatprep.mubr.f32.mxu0 0.0
    %211 = vmatmul.mubr.f32.gmra.mrb[0].mxu0 %v110
    %v212 = vpop.f32.mrb[0].mxu0
    %v213 = vadd.f32 0.0, %v212
    %v214 = vpop.f32.mrb[0].mxu0
    %215 = vmatprep.mubr.f32.mxu0 0.0
    %216 = vmatmul.mubr.f32.gmra.mrb[0].mxu0 %v111
    %v217 = vpop.f32.mrb[0].mxu0
    %v218 = vadd.f32 0.0, %v217
    %v219 = vpop.f32.mrb[0].mxu0
    %220 = vmatprep.mubr.f32.mxu0 0.0
    %221 = vmatmul.mubr.f32.gmra.mrb[0].mxu0 %v112
    %v222 = vpop.f32.mrb[0].mxu0
    %v223 = vadd.f32 0.0, %v222
    %v224 = vpop.f32.mrb[0].mxu0
    %225 = vmatprep.mubr.f32.mxu0 0.0
    %226 = vmatmul.mubr.f32.gmra.mrb[0].mxu0 %v113
    %v227 = vpop.f32.mrb[0].mxu0
    %v228 = vadd.f32 0.0, %v227
    %v229 = vpop.f32.mrb[0].mxu0
    %230 = vmatprep.mubr.f32.mxu0 0.0
    %231 = vmatmul.mubr.f32.gmra.mrb[0].mxu0 %v114
    %v232 = vpop.f32.mrb[0].mxu0
    %v233 = vadd.f32 0.0, %v232
    %v234 = vpop.f32.mrb[0].mxu0
    %235 = vmatprep.mubr.f32.mxu0 0.0
    %236 = vmatmul.mubr.f32.gmra.mrb[0].mxu0 %v115
    %v237 = vpop.f32.mrb[0].mxu0
    %v238 = vadd.f32 0.0, %v237
    %v239 = vpop.f32.mrb[0].mxu0
    %240 = vmatprep.mubr.f32.mxu0 0.0
    %241 = vmatmul.mubr.f32.gmra.mrb[0].mxu0 %v116
    %v242 = vpop.f32.mrb[0].mxu0
    %v243 = vadd.f32 0.0, %v242
    %v244 = vpop.f32.mrb[0].mxu0
    %245 = vmatprep.mubr.f32.mxu0 0.0
    %246 = vmatmul.mubr.f32.gmra.mrb[0].mxu0 %v117
    %v247 = vpop.f32.mrb[0].mxu0
    %v248 = vadd.f32 0.0, %v247
    %v249 = vpop.f32.mrb[0].mxu0
    %250 = vmatprep.mubr.f32.mxu0 0.0
    %251 = vmatmul.mubr.f32.gmra.mrb[0].mxu0 %v118
    %v252 = vpop.f32.mrb[0].mxu0
    %v253 = vadd.f32 0.0, %v252
    %v254 = vpop.f32.mrb[0].mxu0
    %255 = vmatprep.mubr.f32.mxu0 0.0
    %256 = vmatmul.mubr.f32.gmra.mrb[0].mxu0 %v119
    %v257 = vpop.f32.mrb[0].mxu0
    %v258 = vadd.f32 0.0, %v257
    %v259 = vpop.f32.mrb[0].mxu0
    %260 = vmatprep.mubr.f32.mxu0 0.0
    %261 = vmatmul.mubr.f32.gmra.mrb[0].mxu0 %v120
    %v262 = vpop.f32.mrb[0].mxu0
    %v263 = vadd.f32 0.0, %v262
    %v264 = vpop.f32.mrb[0].mxu0
    %265 = vmatprep.mubr.f32.mxu0 0.0
    %266 = vmatmul.mubr.f32.gmra.mrb[0].mxu0 %v121
    %v267 = vpop.f32.mrb[0].mxu0
    %v268 = vadd.f32 0.0, %v267
    %v269 = vpop.f32.mrb[0].mxu0
    %270 = vmatprep.mubr.f32.mxu0 0.0
    %271 = vmatmul.mubr.f32.gmra.mrb[0].mxu0 %v122
    %v272 = vpop.f32.mrb[0].mxu0
    %v273 = vadd.f32 0.0, %v272
    %v274 = vpop.f32.mrb[0].mxu0
    %275 = vmatprep.mubr.f32.mxu0 0.0
    %276 = vmatmul.mubr.f32.gmra.mrb[0].mxu0 %v123
    %v277 = vpop.f32.mrb[0].mxu0
    %v278 = vadd.f32 0.0, %v277
    %v279 = vpop.f32.mrb[0].mxu0
    %280 = vmatprep.mubr.f32.mxu0 0.0
    %281 = vmatmul.mubr.f32.gmra.mrb[0].mxu0 %v124
    %v282 = vpop.f32.mrb[0].mxu0
    %v283 = vadd.f32 0.0, %v282
    %v284 = vpop.f32.mrb[0].mxu0
    %285 = vdwg.mxu0
    %v286 = vld [vmem:[#allocation2] sm:$0xff]
    %v287 = vld [vmem:[#allocation2 + $0x8] sm:$0xff]
    %v288 = vld [vmem:[#allocation2 + $0x10] sm:$0xff]
    %v289 = vld [vmem:[#allocation2 + $0x18] sm:$0xff]
    %v290 = vld [vmem:[#allocation2 + $0x20] sm:$0xff]
    %v291 = vld [vmem:[#allocation2 + $0x28] sm:$0xff]
    %v292 = vld [vmem:[#allocation2 + $0x30] sm:$0xff]
    %v293 = vld [vmem:[#allocation2 + $0x38] sm:$0xff]
    %v294 = vld [vmem:[#allocation2 + $0x40] sm:$0xff]
    %v295 = vld [vmem:[#allocation2 + $0x48] sm:$0xff]
    %v296 = vld [vmem:[#allocation2 + $0x50] sm:$0xff]
    %v297 = vld [vmem:[#allocation2 + $0x58] sm:$0xff]
    %v298 = vld [vmem:[#allocation2 + $0x60] sm:$0xff]
    %v299 = vld [vmem:[#allocation2 + $0x68] sm:$0xff]
    %v300 = vld [vmem:[#allocation2 + $0x70] sm:$0xff]
    %v301 = vld [vmem:[#allocation2 + $0x78] sm:$0xff]
    %v302 = vld [vmem:[#allocation6] sm:$0xff]
    %v303 = vld [vmem:[#allocation6 + $0x8] sm:$0xff]
    %v304 = vld [vmem:[#allocation6 + $0x10] sm:$0xff]
    %v305 = vld [vmem:[#allocation6 + $0x18] sm:$0xff]
    %v306 = vld [vmem:[#allocation6 + $0x20] sm:$0xff]
    %v307 = vld [vmem:[#allocation6 + $0x28] sm:$0xff]
    %v308 = vld [vmem:[#allocation6 + $0x30] sm:$0xff]
    %v309 = vld [vmem:[#allocation6 + $0x38] sm:$0xff]
    %v310 = vld [vmem:[#allocation6 + $0x40] sm:$0xff]
    %v311 = vld [vmem:[#allocation6 + $0x48] sm:$0xff]
    %v312 = vld [vmem:[#allocation6 + $0x50] sm:$0xff]
    %v313 = vld [vmem:[#allocation6 + $0x58] sm:$0xff]
    %v314 = vld [vmem:[#allocation6 + $0x60] sm:$0xff]
    %v315 = vld [vmem:[#allocation6 + $0x68] sm:$0xff]
    %v316 = vld [vmem:[#allocation6 + $0x70] sm:$0xff]
    %v317 = vld [vmem:[#allocation6 + $0x78] sm:$0xff]
    %318 = vxpose.xlu0.b32.start [1/16] %v302, 128
    %319 = vxpose.xlu0.b32.cont [2/16] %v303, 128
    %320 = vxpose.xlu0.b32.cont [3/16] %v304, 128
    %321 = vxpose.xlu0.b32.cont [4/16] %v305, 128
    %322 = vxpose.xlu0.b32.cont [5/16] %v306, 128
    %323 = vxpose.xlu0.b32.cont [6/16] %v307, 128
    %324 = vxpose.xlu0.b32.cont [7/16] %v308, 128
    %325 = vxpose.xlu0.b32.cont [8/16] %v309, 128
    %326 = vxpose.xlu0.b32.cont [9/16] %v310, 128
    %327 = vxpose.xlu0.b32.cont [10/16] %v311, 128
    %328 = vxpose.xlu0.b32.cont [11/16] %v312, 128
    %329 = vxpose.xlu0.b32.cont [12/16] %v313, 128
    %330 = vxpose.xlu0.b32.cont [13/16] %v314, 128
    %331 = vxpose.xlu0.b32.cont [14/16] %v315, 128
    %332 = vxpose.xlu0.b32.cont [15/16] %v316, 128
    %333 = vxpose.xlu0.b32.end [16/16] %v317, 128
    %v334 = vpop.trf.xlu0
    %v335 = vpop.trf.xlu0
    %v336 = vpop.trf.xlu0
    %v337 = vpop.trf.xlu0
    %v338 = vpop.trf.xlu0
    %v339 = vpop.trf.xlu0
    %v340 = vpop.trf.xlu0
    %v341 = vpop.trf.xlu0
    %v342 = vpop.trf.xlu0
    %v343 = vpop.trf.xlu0
    %v344 = vpop.trf.xlu0
    %v345 = vpop.trf.xlu0
    %v346 = vpop.trf.xlu0
    %v347 = vpop.trf.xlu0
    %v348 = vpop.trf.xlu0
    %v349 = vpop.trf.xlu0
    %350 = vmatprep.subr.mxu0 0.0
    %351 = vmatpush1.msra.mxu0 %v208
    %352 = vmatprep.subr.mxu0 0.0
    %353 = vmatpush1.msra.mxu0 %v213
    %354 = vmatprep.subr.mxu0 0.0
    %355 = vmatpush1.msra.mxu0 %v218
    %356 = vmatprep.subr.mxu0 0.0
    %357 = vmatpush1.msra.mxu0 %v223
    %358 = vmatprep.subr.mxu0 0.0
    %359 = vmatpush1.msra.mxu0 %v228
    %360 = vmatprep.subr.mxu0 0.0
    %361 = vmatpush1.msra.mxu0 %v233
    %362 = vmatprep.subr.mxu0 0.0
    %363 = vmatpush1.msra.mxu0 %v238
    %364 = vmatprep.subr.mxu0 0.0
    %365 = vmatpush1.msra.mxu0 %v243
    %366 = vmatprep.subr.mxu0 0.0
    %367 = vmatpush1.msra.mxu0 %v248
    %368 = vmatprep.subr.mxu0 0.0
    %369 = vmatpush1.msra.mxu0 %v253
    %370 = vmatprep.subr.mxu0 0.0
    %371 = vmatpush1.msra.mxu0 %v258
    %372 = vmatprep.subr.mxu0 0.0
    %373 = vmatpush1.msra.mxu0 %v263
    %374 = vmatprep.subr.mxu0 0.0
    %375 = vmatpush1.msra.mxu0 %v268
    %376 = vmatprep.subr.mxu0 0.0
    %377 = vmatpush1.msra.mxu0 %v273
    %378 = vmatprep.subr.mxu0 0.0
    %379 = vmatpush1.msra.mxu0 %v278
    %380 = vmatprep.subr.mxu0 0.0
    %381 = vmatpush1.msra.mxu0 %v283
    %382 = vmatprep.subr.mxu0 0.0
    %383 = vmatpush1.msra.mxu0 0.0
    %384 = vmatprep.subr.mxu0 0.0
    %385 = vmatpush1.msra.mxu0 0.0
    %386 = vmatprep.subr.mxu0 0.0
    %387 = vmatpush1.msra.mxu0 0.0
    %388 = vmatprep.subr.mxu0 0.0
    %389 = vmatpush1.msra.mxu0 0.0
    %390 = vmatprep.subr.mxu0 0.0
    %391 = vmatpush1.msra.mxu0 0.0
    %392 = vmatprep.subr.mxu0 0.0
    %393 = vmatpush1.msra.mxu0 0.0
    %394 = vmatprep.subr.mxu0 0.0
    %395 = vmatpush1.msra.mxu0 0.0
    %396 = vmatprep.subr.mxu0 0.0
    %397 = vmatpush1.msra.mxu0 0.0
    %398 = vmatprep.subr.mxu0 0.0
    %399 = vmatpush1.msra.mxu0 0.0
    %400 = vmatprep.subr.mxu0 0.0
    %401 = vmatpush1.msra.mxu0 0.0
    %402 = vmatprep.subr.mxu0 0.0
    %403 = vmatpush1.msra.mxu0 0.0
    %404 = vmatprep.subr.mxu0 0.0
    %405 = vmatpush1.msra.mxu0 0.0
    %406 = vmatprep.subr.mxu0 0.0
    %407 = vmatpush1.msra.mxu0 0.0
    %408 = vmatprep.subr.mxu0 0.0
    %409 = vmatpush1.msra.mxu0 0.0
    %410 = vmatprep.subr.mxu0 0.0
    %411 = vmatpush1.msra.mxu0 0.0
    %412 = vmatprep.subr.mxu0 0.0
    %413 = vmatpush1.msra.mxu0 0.0
    %414 = vmatprep.mubr.f32.mxu0 0.0
    %415 = vmatmul.mubr.f32.gmra.mrb[0].mxu0 %v334
    %v416 = vpop.f32.mrb[0].mxu0
    %v417 = vadd.f32 0.0, %v416
    %v418 = vpop.f32.mrb[0].mxu0
    %419 = vmatprep.mubr.f32.mxu0 0.0
    %420 = vmatmul.mubr.f32.gmra.mrb[0].mxu0 %v335
    %v421 = vpop.f32.mrb[0].mxu0
    %v422 = vadd.f32 0.0, %v421
    %v423 = vpop.f32.mrb[0].mxu0
    %424 = vmatprep.mubr.f32.mxu0 0.0
    %425 = vmatmul.mubr.f32.gmra.mrb[0].mxu0 %v336
    %v426 = vpop.f32.mrb[0].mxu0
    %v427 = vadd.f32 0.0, %v426
    %v428 = vpop.f32.mrb[0].mxu0
    %429 = vmatprep.mubr.f32.mxu0 0.0
    %430 = vmatmul.mubr.f32.gmra.mrb[0].mxu0 %v337
    %v431 = vpop.f32.mrb[0].mxu0
    %v432 = vadd.f32 0.0, %v431
    %v433 = vpop.f32.mrb[0].mxu0
    %434 = vmatprep.mubr.f32.mxu0 0.0
    %435 = vmatmul.mubr.f32.gmra.mrb[0].mxu0 %v338
    %v436 = vpop.f32.mrb[0].mxu0
    %v437 = vadd.f32 0.0, %v436
    %v438 = vpop.f32.mrb[0].mxu0
    %439 = vmatprep.mubr.f32.mxu0 0.0
    %440 = vmatmul.mubr.f32.gmra.mrb[0].mxu0 %v339
    %v441 = vpop.f32.mrb[0].mxu0
    %v442 = vadd.f32 0.0, %v441
    %v443 = vpop.f32.mrb[0].mxu0
    %444 = vmatprep.mubr.f32.mxu0 0.0
    %445 = vmatmul.mubr.f32.gmra.mrb[0].mxu0 %v340
    %v446 = vpop.f32.mrb[0].mxu0
    %v447 = vadd.f32 0.0, %v446
    %v448 = vpop.f32.mrb[0].mxu0
    %449 = vmatprep.mubr.f32.mxu0 0.0
    %450 = vmatmul.mubr.f32.gmra.mrb[0].mxu0 %v341
    %v451 = vpop.f32.mrb[0].mxu0
    %v452 = vadd.f32 0.0, %v451
    %v453 = vpop.f32.mrb[0].mxu0
    %454 = vmatprep.mubr.f32.mxu0 0.0
    %455 = vmatmul.mubr.f32.gmra.mrb[0].mxu0 %v342
    %v456 = vpop.f32.mrb[0].mxu0
    %v457 = vadd.f32 0.0, %v456
    %v458 = vpop.f32.mrb[0].mxu0
    %459 = vmatprep.mubr.f32.mxu0 0.0
    %460 = vmatmul.mubr.f32.gmra.mrb[0].mxu0 %v343
    %v461 = vpop.f32.mrb[0].mxu0
    %v462 = vadd.f32 0.0, %v461
    %v463 = vpop.f32.mrb[0].mxu0
    %464 = vmatprep.mubr.f32.mxu0 0.0
    %465 = vmatmul.mubr.f32.gmra.mrb[0].mxu0 %v344
    %v466 = vpop.f32.mrb[0].mxu0
    %v467 = vadd.f32 0.0, %v466
    %v468 = vpop.f32.mrb[0].mxu0
    %469 = vmatprep.mubr.f32.mxu0 0.0
    %470 = vmatmul.mubr.f32.gmra.mrb[0].mxu0 %v345
    %v471 = vpop.f32.mrb[0].mxu0
    %v472 = vadd.f32 0.0, %v471
    %v473 = vpop.f32.mrb[0].mxu0
    %474 = vmatprep.mubr.f32.mxu0 0.0
    %475 = vmatmul.mubr.f32.gmra.mrb[0].mxu0 %v346
    %v476 = vpop.f32.mrb[0].mxu0
    %v477 = vadd.f32 0.0, %v476
    %v478 = vpop.f32.mrb[0].mxu0
    %479 = vmatprep.mubr.f32.mxu0 0.0
    %480 = vmatmul.mubr.f32.gmra.mrb[0].mxu0 %v347
    %v481 = vpop.f32.mrb[0].mxu0
    %v482 = vadd.f32 0.0, %v481
    %v483 = vpop.f32.mrb[0].mxu0
    %484 = vmatprep.mubr.f32.mxu0 0.0
    %485 = vmatmul.mubr.f32.gmra.mrb[0].mxu0 %v348
    %v486 = vpop.f32.mrb[0].mxu0
    %v487 = vadd.f32 0.0, %v486
    %v488 = vpop.f32.mrb[0].mxu0
    %489 = vmatprep.mubr.f32.mxu0 0.0
    %490 = vmatmul.mubr.f32.gmra.mrb[0].mxu0 %v349
    %v491 = vpop.f32.mrb[0].mxu0
    %v492 = vadd.f32 0.0, %v491
    %v493 = vpop.f32.mrb[0].mxu0
    %494 = vdwg.mxu0
    %v495 = vadd.f32 %v286, %v417
    %v496 = vadd.f32 %v287, %v422
    %v497 = vadd.f32 %v288, %v427
    %v498 = vadd.f32 %v289, %v432
    %v499 = vadd.f32 %v290, %v437
    %v500 = vadd.f32 %v291, %v442
    %v501 = vadd.f32 %v292, %v447
    %v502 = vadd.f32 %v293, %v452
    %v503 = vadd.f32 %v294, %v457
    %v504 = vadd.f32 %v295, %v462
    %v505 = vadd.f32 %v296, %v467
    %v506 = vadd.f32 %v297, %v472
    %v507 = vadd.f32 %v298, %v477
    %v508 = vadd.f32 %v299, %v482
    %v509 = vadd.f32 %v300, %v487
    %v510 = vadd.f32 %v301, %v492
    %511 = vst [vmem:[#allocation2] sm:$0xff] %v495
    %512 = vst [vmem:[#allocation2 + $0x8] sm:$0xff] %v496
    %513 = vst [vmem:[#allocation2 + $0x10] sm:$0xff] %v497
    %514 = vst [vmem:[#allocation2 + $0x18] sm:$0xff] %v498
    %515 = vst [vmem:[#allocation2 + $0x20] sm:$0xff] %v499
    %516 = vst [vmem:[#allocation2 + $0x28] sm:$0xff] %v500
    %517 = vst [vmem:[#allocation2 + $0x30] sm:$0xff] %v501
    %518 = vst [vmem:[#allocation2 + $0x38] sm:$0xff] %v502
    %519 = vst [vmem:[#allocation2 + $0x40] sm:$0xff] %v503
    %520 = vst [vmem:[#allocation2 + $0x48] sm:$0xff] %v504
    %521 = vst [vmem:[#allocation2 + $0x50] sm:$0xff] %v505
    %522 = vst [vmem:[#allocation2 + $0x58] sm:$0xff] %v506
    %523 = vst [vmem:[#allocation2 + $0x60] sm:$0xff] %v507
    %524 = vst [vmem:[#allocation2 + $0x68] sm:$0xff] %v508
    %525 = vst [vmem:[#allocation2 + $0x70] sm:$0xff] %v509
    %526 = vst [vmem:[#allocation2 + $0x78] sm:$0xff] %v510
    // Predicated region
    $region46: #{tpu_custom_call.1} parent=1 // pred_check
      %p527 = pneg %p89
    $region47: #{tpu_custom_call.1} parent=1 // pred_check_branch
      %529 = sbr.rel (%p527) target = $region49
    $region48: #{tpu_custom_call.1} parent=1 // pred_region
      %v530 = vld [vmem:[#allocation2] sm:$0xff]
      %v531 = vld [vmem:[#allocation2 + $0x8] sm:$0xff]
      %v532 = vld [vmem:[#allocation2 + $0x10] sm:$0xff]
      %v533 = vld [vmem:[#allocation2 + $0x18] sm:$0xff]
      %v534 = vld [vmem:[#allocation2 + $0x20] sm:$0xff]
      %v535 = vld [vmem:[#allocation2 + $0x28] sm:$0xff]
      %v536 = vld [vmem:[#allocation2 + $0x30] sm:$0xff]
      %v537 = vld [vmem:[#allocation2 + $0x38] sm:$0xff]
      %v538 = vld [vmem:[#allocation2 + $0x40] sm:$0xff]
      %v539 = vld [vmem:[#allocation2 + $0x48] sm:$0xff]
      %v540 = vld [vmem:[#allocation2 + $0x50] sm:$0xff]
      %v541 = vld [vmem:[#allocation2 + $0x58] sm:$0xff]
      %v542 = vld [vmem:[#allocation2 + $0x60] sm:$0xff]
      %v543 = vld [vmem:[#allocation2 + $0x68] sm:$0xff]
      %v544 = vld [vmem:[#allocation2 + $0x70] sm:$0xff]
      %v545 = vld [vmem:[#allocation2 + $0x78] sm:$0xff]
      %v546 = vmax.f32 %v530, 0.0
      %v547 = vmax.f32 %v531, 0.0
      %v548 = vmax.f32 %v532, 0.0
      %v549 = vmax.f32 %v533, 0.0
      %v550 = vmax.f32 %v534, 0.0
      %v551 = vmax.f32 %v535, 0.0
      %v552 = vmax.f32 %v536, 0.0
      %v553 = vmax.f32 %v537, 0.0
      %v554 = vmax.f32 %v538, 0.0
      %v555 = vmax.f32 %v539, 0.0
      %v556 = vmax.f32 %v540, 0.0
      %v557 = vmax.f32 %v541, 0.0
      %v558 = vmax.f32 %v542, 0.0
      %v559 = vmax.f32 %v543, 0.0
      %v560 = vmax.f32 %v544, 0.0
      %v561 = vmax.f32 %v545, 0.0
      %v562 = vld [vmem:[#allocation8] sm:$0xff]
      %v563 = vld [vmem:[#allocation8 + $0x8] sm:$0xff]
      %564 = vmatprep.subr.mxu0 0.0
      %565 = vmatpush1.msra.mxu0 %v546
      %566 = vmatprep.subr.mxu0 0.0
      %567 = vmatpush1.msra.mxu0 %v547
      %568 = vmatprep.subr.mxu0 0.0
      %569 = vmatpush1.msra.mxu0 %v548
      %570 = vmatprep.subr.mxu0 0.0
      %571 = vmatpush1.msra.mxu0 %v549
      %572 = vmatprep.subr.mxu0 0.0
      %573 = vmatpush1.msra.mxu0 %v550
      %574 = vmatprep.subr.mxu0 0.0
      %575 = vmatpush1.msra.mxu0 %v551
      %576 = vmatprep.subr.mxu0 0.0
      %577 = vmatpush1.msra.mxu0 %v552
      %578 = vmatprep.subr.mxu0 0.0
      %579 = vmatpush1.msra.mxu0 %v553
      %580 = vmatprep.subr.mxu0 0.0
      %581 = vmatpush1.msra.mxu0 %v554
      %582 = vmatprep.subr.mxu0 0.0
      %583 = vmatpush1.msra.mxu0 %v555
      %584 = vmatprep.subr.mxu0 0.0
      %585 = vmatpush1.msra.mxu0 %v556
      %586 = vmatprep.subr.mxu0 0.0
      %587 = vmatpush1.msra.mxu0 %v557
      %588 = vmatprep.subr.mxu0 0.0
      %589 = vmatpush1.msra.mxu0 %v558
      %590 = vmatprep.subr.mxu0 0.0
      %591 = vmatpush1.msra.mxu0 %v559
      %592 = vmatprep.subr.mxu0 0.0
      %593 = vmatpush1.msra.mxu0 %v560
      %594 = vmatprep.subr.mxu0 0.0
      %595 = vmatpush1.msra.mxu0 %v561
      %596 = vmatprep.subr.mxu0 0.0
      %597 = vmatpush1.msra.mxu0 0.0
      %598 = vmatprep.subr.mxu0 0.0
      %599 = vmatpush1.msra.mxu0 0.0
      %600 = vmatprep.subr.mxu0 0.0
      %601 = vmatpush1.msra.mxu0 0.0
      %602 = vmatprep.subr.mxu0 0.0
      %603 = vmatpush1.msra.mxu0 0.0
      %604 = vmatprep.subr.mxu0 0.0
      %605 = vmatpush1.msra.mxu0 0.0
      %606 = vmatprep.subr.mxu0 0.0
      %607 = vmatpush1.msra.mxu0 0.0
      %608 = vmatprep.subr.mxu0 0.0
      %609 = vmatpush1.msra.mxu0 0.0
      %610 = vmatprep.subr.mxu0 0.0
      %611 = vmatpush1.msra.mxu0 0.0
      %612 = vmatprep.subr.mxu0 0.0
      %613 = vmatpush1.msra.mxu0 0.0
      %614 = vmatprep.subr.mxu0 0.0
      %615 = vmatpush1.msra.mxu0 0.0
      %616 = vmatprep.subr.mxu0 0.0
      %617 = vmatpush1.msra.mxu0 0.0
      %618 = vmatprep.subr.mxu0 0.0
      %619 = vmatpush1.msra.mxu0 0.0
      %620 = vmatprep.subr.mxu0 0.0
      %621 = vmatpush1.msra.mxu0 0.0
      %622 = vmatprep.subr.mxu0 0.0
      %623 = vmatpush1.msra.mxu0 0.0
      %624 = vmatprep.subr.mxu0 0.0
      %625 = vmatpush1.msra.mxu0 0.0
      %626 = vmatprep.subr.mxu0 0.0
      %627 = vmatpush1.msra.mxu0 0.0
      %628 = vmatprep.mubr.f32.mxu0 0.0
      %629 = vmatmul.mubr.f32.gmra.mrb[0].mxu0 %v562
      %v630 = vpop.f32.mrb[0].mxu0
      %v631 = vadd.f32 0.0, %v630
      %v632 = vpop.f32.mrb[0].mxu0
      %633 = vmatprep.mubr.f32.mxu0 0.0
      %634 = vmatmul.mubr.f32.gmra.mrb[0].mxu0 %v563
      %v635 = vpop.f32.mrb[0].mxu0
      %v636 = vadd.f32 0.0, %v635
      %v637 = vpop.f32.mrb[0].mxu0
      %638 = vdwg.mxu0
      %v639 = vld [vmem:[#allocation11] sm:$0xff]
      %v640 = vld [vmem:[#allocation11 + $0x8] sm:$0xff]
      %v641 = vld [vmem:[#allocation11 + $0x10] sm:$0xff]
      %v642 = vld [vmem:[#allocation11 + $0x18] sm:$0xff]
      %v643 = vld [vmem:[#allocation11 + $0x20] sm:$0xff]
      %v644 = vld [vmem:[#allocation11 + $0x28] sm:$0xff]
      %v645 = vld [vmem:[#allocation11 + $0x30] sm:$0xff]
      %v646 = vld [vmem:[#allocation11 + $0x38] sm:$0xff]
      %v647 = vld [vmem:[#allocation11 + $0x40] sm:$0xff]
      %v648 = vld [vmem:[#allocation11 + $0x48] sm:$0xff]
      %v649 = vld [vmem:[#allocation11 + $0x50] sm:$0xff]
      %v650 = vld [vmem:[#allocation11 + $0x58] sm:$0xff]
      %v651 = vld [vmem:[#allocation11 + $0x60] sm:$0xff]
      %v652 = vld [vmem:[#allocation11 + $0x68] sm:$0xff]
      %v653 = vld [vmem:[#allocation11 + $0x70] sm:$0xff]
      %v654 = vld [vmem:[#allocation11 + $0x78] sm:$0xff]
      %655 = vmatprep.subr.mxu0 0.0
      %656 = vmatpush1.msra.mxu0 %v639
      %657 = vmatprep.subr.mxu0 0.0
      %658 = vmatpush1.msra.mxu0 %v640
      %659 = vmatprep.subr.mxu0 0.0
      %660 = vmatpush1.msra.mxu0 %v641
      %661 = vmatprep.subr.mxu0 0.0
      %662 = vmatpush1.msra.mxu0 %v642
      %663 = vmatprep.subr.mxu0 0.0
      %664 = vmatpush1.msra.mxu0 %v643
      %665 = vmatprep.subr.mxu0 0.0
      %666 = vmatpush1.msra.mxu0 %v644
      %667 = vmatprep.subr.mxu0 0.0
      %668 = vmatpush1.msra.mxu0 %v645
      %669 = vmatprep.subr.mxu0 0.0
      %670 = vmatpush1.msra.mxu0 %v646
      %671 = vmatprep.subr.mxu0 0.0
      %672 = vmatpush1.msra.mxu0 %v647
      %673 = vmatprep.subr.mxu0 0.0
      %674 = vmatpush1.msra.mxu0 %v648
      %675 = vmatprep.subr.mxu0 0.0
      %676 = vmatpush1.msra.mxu0 %v649
      %677 = vmatprep.subr.mxu0 0.0
      %678 = vmatpush1.msra.mxu0 %v650
      %679 = vmatprep.subr.mxu0 0.0
      %680 = vmatpush1.msra.mxu0 %v651
      %681 = vmatprep.subr.mxu0 0.0
      %682 = vmatpush1.msra.mxu0 %v652
      %683 = vmatprep.subr.mxu0 0.0
      %684 = vmatpush1.msra.mxu0 %v653
      %685 = vmatprep.subr.mxu0 0.0
      %686 = vmatpush1.msra.mxu0 %v654
      %687 = vmatprep.subr.mxu0 0.0
      %688 = vmatpush1.msra.mxu0 0.0
      %689 = vmatprep.subr.mxu0 0.0
      %690 = vmatpush1.msra.mxu0 0.0
      %691 = vmatprep.subr.mxu0 0.0
      %692 = vmatpush1.msra.mxu0 0.0
      %693 = vmatprep.subr.mxu0 0.0
      %694 = vmatpush1.msra.mxu0 0.0
      %695 = vmatprep.subr.mxu0 0.0
      %696 = vmatpush1.msra.mxu0 0.0
      %697 = vmatprep.subr.mxu0 0.0
      %698 = vmatpush1.msra.mxu0 0.0
      %699 = vmatprep.subr.mxu0 0.0
      %700 = vmatpush1.msra.mxu0 0.0
      %701 = vmatprep.subr.mxu0 0.0
      %702 = vmatpush1.msra.mxu0 0.0
      %703 = vmatprep.subr.mxu0 0.0
      %704 = vmatpush1.msra.mxu0 0.0
      %705 = vmatprep.subr.mxu0 0.0
      %706 = vmatpush1.msra.mxu0 0.0
      %707 = vmatprep.subr.mxu0 0.0
      %708 = vmatpush1.msra.mxu0 0.0
      %709 = vmatprep.subr.mxu0 0.0
      %710 = vmatpush1.msra.mxu0 0.0
      %711 = vmatprep.subr.mxu0 0.0
      %712 = vmatpush1.msra.mxu0 0.0
      %713 = vmatprep.subr.mxu0 0.0
      %714 = vmatpush1.msra.mxu0 0.0
      %715 = vmatprep.subr.mxu0 0.0
      %716 = vmatpush1.msra.mxu0 0.0
      %717 = vmatprep.subr.mxu0 0.0
      %718 = vmatpush1.msra.mxu0 0.0
      %719 = vmatprep.mubr.f32.mxu0 0.0
      %720 = vmatmul.mubr.f32.gmra.mrb[0].mxu0 %v631
      %v721 = vpop.f32.mrb[0].mxu0
      %v722 = vadd.f32 0.0, %v721
      %v723 = vpop.f32.mrb[0].mxu0
      %724 = vmatprep.mubr.f32.mxu0 0.0
      %725 = vmatmul.mubr.f32.gmra.mrb[0].mxu0 %v636
      %v726 = vpop.f32.mrb[0].mxu0
      %v727 = vadd.f32 0.0, %v726
      %v728 = vpop.f32.mrb[0].mxu0
      %729 = vdwg.mxu0
      %v730 = vlaneseq
      %v731 = vand.u32 %v730, 127
      %vm732 = vcmp.lt.s32.totalorder %v731, 8
      %v733 = vsel %vm732, %v722, -1.7014117e+38
      %v734 = vsel %vm732, %v727, -1.7014117e+38
      %735 = vmax.xlane.f32.xlu0 %v733
      %v736 = vpop.xlane.xlu0 %735
      %737 = vmax.xlane.f32.xlu0 %v734
      %v738 = vpop.xlane.xlu0 %737
      %v739 = vsub.f32 %v733, %v736
      %v740 = vsub.f32 %v734, %v738
      %v741 = vmul.f32 %v739, 1.442695
      %v742 = vpow.pop %v741
      %v743 = vmul.f32 %v740, 1.442695
      %v744 = vpow.pop %v743
      %745 = vadd.xlane.f32.xlu0 %v742
      %v746 = vpop.xlane.xlu0 %745
      %747 = vadd.xlane.f32.xlu0 %v744
      %v748 = vpop.xlane.xlu0 %747
      %v749 = vlog2.pop %v746
      %v750 = vmul.f32 %v749, 0.6931472
      %v751 = vlog2.pop %v748
      %v752 = vmul.f32 %v751, 0.6931472
      %v753 = vsub.f32 %v739, %v750
      %v754 = vsub.f32 %v740, %v752
      %755 = vst [vmem:[#allocation12] sm:$0xff] %v753
      %756 = vst [vmem:[#allocation12 + $0x8] sm:$0xff] %v754
    $region49: #{tpu_custom_call.1} parent=1 // pred_fallthru
      _
    // Predicated region
    $region50: #{tpu_custom_call.1} parent=1 // pred_check
      _
    $region51: #{tpu_custom_call.1} parent=1 // pred_check_branch
      %758 = sbr.rel (0) target = $region53
    $region52: #{tpu_custom_call.1} parent=1 // pred_region
      %s760 = ssub.s32 256, 256
      %761 = vsyncadd [#allocation5], %s760
      %s762 = sshll.u32 [#allocation12], 4
      %s763 = int_to_ptr.vmem [resolvable:$true] %s762
      %768 = dma.vmem_to_hbm [thread:$0]  %s763, 256, %s5, [#allocation5], 128, 128, 8
    $region53: #{tpu_custom_call.1} parent=1 // pred_fallthru
      _
    // Predicated region
    $region54: #{tpu_custom_call.1} parent=1 // pred_check
      _
    $region55: #{tpu_custom_call.1} parent=1 // pred_check_branch
      %770 = sbr.rel (0) target = $region57
    $region56: #{tpu_custom_call.1} parent=1 // pred_region
      %771 = dma.done [#allocation5], 256
    $region57: #{tpu_custom_call.1} parent=1 // pred_fallthru
      _
    %772 = vsyncpa [#allocation4], 1
    %773 = vsyncpa [#allocation7], 1
    %774 = vsyncpa [#allocation10], 1
    %775 = vsyncpa [#allocation5], 1

// kernel: tpu_custom_call.1
$region0: #{tpu_custom_call.1}
  #allocation0 [shape = 'u32[]', space=smem, size = 0x4, offset = 0x4, fixed_abs, tag = 'smem constant byte address 0x4 - core index']
  #allocation1 [shape = 'u32[144,128]{1,0:T(1,128)}', space=vmem, size = 0x12000, scoped, tag = 'internal scratch']
  #allocation2 [shape = 'f32[128,128]{1,0:T(8,128)}', space=vmem, size = 0x10000, scoped, tag = 'scratch operand']
  %s0 = inlined_call_operand.hbm [shape: f32[128,128], index: 0, kind: input, shape index: {}]
  %s1 = inlined_call_operand.hbm [shape: f32[128,128], index: 1, kind: input, shape index: {}]
  %s2 = inlined_call_operand.hbm [shape: f32[16,128], index: 2, kind: input, shape index: {}]
  %s3 = inlined_call_operand.hbm [shape: f32[128,128], index: 3, kind: input, shape index: {}]
  %s4 = inlined_call_operand.hbm [shape: f32[128,128], index: 4, kind: input, shape index: {}]
  %s5 = inlined_call_operand.hbm [shape: f32[16,128], index: 5, kind: output, shape index: {}]
  %s6 = sld [smem:[#allocation0]]
  $region58: #{tpu_custom_call.1} parent=0
    _
  %s8 = ssub.s32 1, %s6
  %s9 = scalar_select 0, %s8, %s6
  $region1: #{tpu_custom_call.1} parent=0
    #allocation3 [shape = 'u8[65536]{0}', space=vmem, size = 0x10000, scoped, tag = 'input window, operand 0, single buffered']
    #allocation4 [shape = 's32[1]{0}', space=sflag, size = 0x4, scoped, tag = 'scoped memory for tpu_custom_call.1']
    #allocation5 [shape = 's32[1]{0}', space=sflag, size = 0x4, scoped, tag = 'scoped memory for tpu_custom_call.1']
    #allocation6 [shape = 'u8[65536]{0}', space=vmem, size = 0x10000, scoped, tag = 'input window, operand 1, single buffered']
    #allocation7 [shape = 's32[1]{0}', space=sflag, size = 0x4, scoped, tag = 'scoped memory for tpu_custom_call.1']
    #allocation8 [shape = 'u8[8192]{0}', space=vmem, size = 0x2000, scoped, tag = 'input window, operand 2, single buffered']
    #allocation9 [shape = 'u8[65536]{0}', space=vmem, size = 0x10000, scoped, tag = 'input window, operand 3, single buffered']
    #allocation10 [shape = 's32[1]{0}', space=sflag, size = 0x4, scoped, tag = 'scoped memory for tpu_custom_call.1']
    #allocation11 [shape = 'u8[65536]{0}', space=vmem, size = 0x10000, scoped, tag = 'input window, operand 4, single buffered']
    #allocation12 [shape = 'u8[8192]{0}', space=vmem, size = 0x2000, scoped, tag = 'output window, operand 0, single buffered']
    %10 = vsyncpa [#allocation4], 0
    %11 = vsyncpa [#allocation7], 0
    %12 = vsyncpa [#allocation10], 0
    %13 = vsyncpa [#allocation5], 0
    // Predicated region
    $region2: #{tpu_custom_call.1} parent=1 // pred_check
      _
    $region3: #{tpu_custom_call.1} parent=1 // pred_check_branch
      %15 = sbr.rel (0) target = $region5
    $region4: #{tpu_custom_call.1} parent=1 // pred_region
      %s17 = ssub.s32 2048, 2048
      %18 = vsyncadd [#allocation4], %s17
      %s19 = sshll.u32 [#allocation3], 4
      %s20 = int_to_ptr.vmem [resolvable:$true] %s19
      %25 = dma.hbm_to_vmem [thread:$0]  %s0, 2048, %s20, [#allocation4], 128, 128, 8
    $region5: #{tpu_custom_call.1} parent=1 // pred_fallthru
      _
    // Predicated region
    $region6: #{tpu_custom_call.1} parent=1 // pred_check
      _
    $region7: #{tpu_custom_call.1} parent=1 // pred_check_branch
      %27 = sbr.rel (0) target = $region9
    $region8: #{tpu_custom_call.1} parent=1 // pred_region
      %s29 = ssub.s32 2048, 2048
      %30 = vsyncadd [#allocation7], %s29
      %s31 = sshll.u32 [#allocation6], 4
      %s32 = int_to_ptr.vmem [resolvable:$true] %s31
      %37 = dma.hbm_to_vmem [thread:$0]  %s1, 2048, %s32, [#allocation7], 128, 128, 8
    $region9: #{tpu_custom_call.1} parent=1 // pred_fallthru
      _
    // Predicated region
    $region10: #{tpu_custom_call.1} parent=1 // pred_check
      _
    $region11: #{tpu_custom_call.1} parent=1 // pred_check_branch
      %39 = sbr.rel (0) target = $region13
    $region12: #{tpu_custom_call.1} parent=1 // pred_region
      %s41 = ssub.s32 256, 256
      %42 = vsyncadd [#allocation7], %s41
      %s43 = sshll.u32 [#allocation8], 4
      %s44 = int_to_ptr.vmem [resolvable:$true] %s43
      %49 = dma.hbm_to_vmem [thread:$0]  %s2, 256, %s44, [#allocation7], 128, 128, 8
    $region13: #{tpu_custom_call.1} parent=1 // pred_fallthru
      _
    // Predicated region
    $region14: #{tpu_custom_call.1} parent=1 // pred_check
      _
    $region15: #{tpu_custom_call.1} parent=1 // pred_check_branch
      %51 = sbr.rel (0) target = $region17
    $region16: #{tpu_custom_call.1} parent=1 // pred_region
      %s53 = ssub.s32 2048, 2048
      %54 = vsyncadd [#allocation10], %s53
      %s55 = sshll.u32 [#allocation9], 4
      %s56 = int_to_ptr.vmem [resolvable:$true] %s55
      %61 = dma.hbm_to_vmem [thread:$0]  %s3, 2048, %s56, [#allocation10], 128, 128, 8
    $region17: #{tpu_custom_call.1} parent=1 // pred_fallthru
      _
    // Predicated region
    $region18: #{tpu_custom_call.1} parent=1 // pred_check
      _
    $region19: #{tpu_custom_call.1} parent=1 // pred_check_branch
      %63 = sbr.rel (0) target = $region21
    $region20: #{tpu_custom_call.1} parent=1 // pred_region
      %s65 = ssub.s32 2048, 2048
      %66 = vsyncadd [#allocation10], %s65
      %s67 = sshll.u32 [#allocation11], 4
      %s68 = int_to_ptr.vmem [resolvable:$true] %s67
      %73 = dma.hbm_to_vmem [thread:$0]  %s4, 2048, %s68, [#allocation10], 128, 128, 8
    $region21: #{tpu_custom_call.1} parent=1 // pred_fallthru
      _
    // Predicated region
    $region22: #{tpu_custom_call.1} parent=1 // pred_check
      _
    $region23: #{tpu_custom_call.1} parent=1 // pred_check_branch
      %75 = sbr.rel (0) target = $region25
    $region24: #{tpu_custom_call.1} parent=1 // pred_region
      %76 = dma.done [#allocation4], 2048
    $region25: #{tpu_custom_call.1} parent=1 // pred_fallthru
      _
    // Predicated region
    $region26: #{tpu_custom_call.1} parent=1 // pred_check
      _
    $region27: #{tpu_custom_call.1} parent=1 // pred_check_branch
      %78 = sbr.rel (0) target = $region29
    $region28: #{tpu_custom_call.1} parent=1 // pred_region
      %79 = dma.done [#allocation7], 2048
    $region29: #{tpu_custom_call.1} parent=1 // pred_fallthru
      _
    // Predicated region
    $region30: #{tpu_custom_call.1} parent=1 // pred_check
      _
    $region31: #{tpu_custom_call.1} parent=1 // pred_check_branch
      %81 = sbr.rel (0) target = $region33
    $region32: #{tpu_custom_call.1} parent=1 // pred_region
      %82 = dma.done [#allocation7], 256
    $region33: #{tpu_custom_call.1} parent=1 // pred_fallthru
      _
    // Predicated region
    $region34: #{tpu_custom_call.1} parent=1 // pred_check
      _
    $region35: #{tpu_custom_call.1} parent=1 // pred_check_branch
      %84 = sbr.rel (0) target = $region37
    $region36: #{tpu_custom_call.1} parent=1 // pred_region
      %85 = dma.done [#allocation10], 2048
    $region37: #{tpu_custom_call.1} parent=1 // pred_fallthru
      _
    // Predicated region
    $region38: #{tpu_custom_call.1} parent=1 // pred_check
      _
    $region39: #{tpu_custom_call.1} parent=1 // pred_check_branch
      %87 = sbr.rel (0) target = $region41
    $region40: #{tpu_custom_call.1} parent=1 // pred_region
      %88 = dma.done [#allocation10], 2048
    $region41: #{tpu_custom_call.1} parent=1 // pred_fallthru
      _
    %p89 = scmp.eq.s32.totalorder 0, 0
    // Predicated region
    $region42: #{tpu_custom_call.1} parent=1 // pred_check
      %p90 = pneg %p89
    $region43: #{tpu_custom_call.1} parent=1 // pred_check_branch
      %92 = sbr.rel (%p90) target = $region45
    $region44: #{tpu_custom_call.1} parent=1 // pred_region
      %93 = vst [vmem:[#allocation2] sm:$0xff] 0.0
      %94 = vst [vmem:[#allocation2 + $0x8] sm:$0xff] 0.0
      %95 = vst [vmem:[#allocation2 + $0x10] sm:$0xff] 0.0
      %96 = vst [vmem:[#allocation2 + $0x18] sm:$0xff] 0.0
      %97 = vst [vmem:[#allocation2 + $0x20] sm:$0xff] 0.0
      %98 = vst [vmem:[#allocation2 + $0x28] sm:$0xff] 0.0
      %99 = vst [vmem:[#allocation2 + $0x30] sm:$0xff] 0.0
      %100 = vst [vmem:[#allocation2 + $0x38] sm:$0xff] 0.0
      %101 = vst [vmem:[#allocation2 + $0x40] sm:$0xff] 0.0
      %102 = vst [vmem:[#allocation2 + $0x48] sm:$0xff] 0.0
      %103 = vst [vmem:[#allocation2 + $0x50] sm:$0xff] 0.0
      %104 = vst [vmem:[#allocation2 + $0x58] sm:$0xff] 0.0
      %105 = vst [vmem:[#allocation2 + $0x60] sm:$0xff] 0.0
      %106 = vst [vmem:[#allocation2 + $0x68] sm:$0xff] 0.0
      %107 = vst [vmem:[#allocation2 + $0x70] sm:$0xff] 0.0
      %108 = vst [vmem:[#allocation2 + $0x78] sm:$0xff] 0.0
    $region45: #{tpu_custom_call.1} parent=1 // pred_fallthru
      _
    %v109 = vld [vmem:[#allocation3] sm:$0xff]
    %v110 = vld [vmem:[#allocation3 + $0x8] sm:$0xff]
    %v111 = vld [vmem:[#allocation3 + $0x10] sm:$0xff]
    %v112 = vld [vmem:[#allocation3 + $0x18] sm:$0xff]
    %v113 = vld [vmem:[#allocation3 + $0x20] sm:$0xff]
    %v114 = vld [vmem:[#allocation3 + $0x28] sm:$0xff]
    %v115 = vld [vmem:[#allocation3 + $0x30] sm:$0xff]
    %v116 = vld [vmem:[#allocation3 + $0x38] sm:$0xff]
    %v117 = vld [vmem:[#allocation3 + $0x40] sm:$0xff]
    %v118 = vld [vmem:[#allocation3 + $0x48] sm:$0xff]
    %v119 = vld [vmem:[#allocation3 + $0x50] sm:$0xff]
    %v120 = vld [vmem:[#allocation3 + $0x58] sm:$0xff]
    %v121 = vld [vmem:[#allocation3 + $0x60] sm:$0xff]
    %v122 = vld [vmem:[#allocation3 + $0x68] sm:$0xff]
    %v123 = vld [vmem:[#allocation3 + $0x70] sm:$0xff]
    %v124 = vld [vmem:[#allocation3 + $0x78] sm:$0xff]
    %v125 = vld [vmem:[#allocation9] sm:$0xff]
    %v126 = vld [vmem:[#allocation9 + $0x8] sm:$0xff]
    %v127 = vld [vmem:[#allocation9 + $0x10] sm:$0xff]
    %v128 = vld [vmem:[#allocation9 + $0x18] sm:$0xff]
    %v129 = vld [vmem:[#allocation9 + $0x20] sm:$0xff]
    %v130 = vld [vmem:[#allocation9 + $0x28] sm:$0xff]
    %v131 = vld [vmem:[#allocation9 + $0x30] sm:$0xff]
    %v132 = vld [vmem:[#allocation9 + $0x38] sm:$0xff]
    %v133 = vld [vmem:[#allocation9 + $0x40] sm:$0xff]
    %v134 = vld [vmem:[#allocation9 + $0x48] sm:$0xff]
    %v135 = vld [vmem:[#allocation9 + $0x50] sm:$0xff]
    %v136 = vld [vmem:[#allocation9 + $0x58] sm:$0xff]
    %v137 = vld [vmem:[#allocation9 + $0x60] sm:$0xff]
    %v138 = vld [vmem:[#allocation9 + $0x68] sm:$0xff]
    %v139 = vld [vmem:[#allocation9 + $0x70] sm:$0xff]
    %v140 = vld [vmem:[#allocation9 + $0x78] sm:$0xff]
    %141 = vmatprep.subr.mxu0 0.0
    %142 = vmatpush1.msra.mxu0 %v125
    %143 = vmatprep.subr.mxu0 0.0
    %144 = vmatpush1.msra.mxu0 %v126
    %145 = vmatprep.subr.mxu0 0.0
    %146 = vmatpush1.msra.mxu0 %v127
    %147 = vmatprep.subr.mxu0 0.0
    %148 = vmatpush1.msra.mxu0 %v128
    %149 = vmatprep.subr.mxu0 0.0
    %150 = vmatpush1.msra.mxu0 %v129
    %151 = vmatprep.subr.mxu0 0.0
    %152 = vmatpush1.msra.mxu0 %v130
    %153 = vmatprep.subr.mxu0 0.0
    %154 = vmatpush1.msra.mxu0 %v131
    %155 = vmatprep.subr.mxu0 0.0
    %156 = vmatpush1.msra.mxu0 %v132
    %157 = vmatprep.subr.mxu0 0.0
    %158 = vmatpush1.msra.mxu0 %v133
    %159 = vmatprep.subr.mxu0 0.0
    %160 = vmatpush1.msra.mxu0 %v134
    %161 = vmatprep.subr.mxu0 0.0
    %162 = vmatpush1.msra.mxu0 %v135
    %163 = vmatprep.subr.mxu0 0.0
    %164 = vmatpush1.msra.mxu0 %v136
    %165 = vmatprep.subr.mxu0 0.0
    %166 = vmatpush1.msra.mxu0 %v137
    %167 = vmatprep.subr.mxu0 0.0
    %168 = vmatpush1.msra.mxu0 %v138
    %169 = vmatprep.subr.mxu0 0.0
    %170 = vmatpush1.msra.mxu0 %v139
    %171 = vmatprep.subr.mxu0 0.0
    %172 = vmatpush1.msra.mxu0 %v140
    %173 = vmatprep.subr.mxu0 0.0
    %174 = vmatpush1.msra.mxu0 0.0
    %175 = vmatprep.subr.mxu0 0.0
    %176 = vmatpush1.msra.mxu0 0.0
    %177 = vmatprep.subr.mxu0 0.0
    %178 = vmatpush1.msra.mxu0 0.0
    %179 = vmatprep.subr.mxu0 0.0
    %180 = vmatpush1.msra.mxu0 0.0
    %181 = vmatprep.subr.mxu0 0.0
    %182 = vmatpush1.msra.mxu0 0.0
    %183 = vmatprep.subr.mxu0 0.0
    %184 = vmatpush1.msra.mxu0 0.0
    %185 = vmatprep.subr.mxu0 0.0
    %186 = vmatpush1.msra.mxu0 0.0
    %187 = vmatprep.subr.mxu0 0.0
    %188 = vmatpush1.msra.mxu0 0.0
    %189 = vmatprep.subr.mxu0 0.0
    %190 = vmatpush1.msra.mxu0 0.0
    %191 = vmatprep.subr.mxu0 0.0
    %192 = vmatpush1.msra.mxu0 0.0
    %193 = vmatprep.subr.mxu0 0.0
    %194 = vmatpush1.msra.mxu0 0.0
    %195 = vmatprep.subr.mxu0 0.0
    %196 = vmatpush1.msra.mxu0 0.0
    %197 = vmatprep.subr.mxu0 0.0
    %198 = vmatpush1.msra.mxu0 0.0
    %199 = vmatprep.subr.mxu0 0.0
    %200 = vmatpush1.msra.mxu0 0.0
    %201 = vmatprep.subr.mxu0 0.0
    %202 = vmatpush1.msra.mxu0 0.0
    %203 = vmatprep.subr.mxu0 0.0
    %204 = vmatpush1.msra.mxu0 0.0
    %205 = vmatprep.mubr.f32.mxu0 0.0
    %206 = vmatmul.mubr.f32.gmra.mrb[0].mxu0 %v109
    %v207 = vpop.f32.mrb[0].mxu0
    %v208 = vadd.f32 0.0, %v207
    %v209 = vpop.f32.mrb[0].mxu0
    %210 = vmatprep.mubr.f32.mxu0 0.0
    %211 = vmatmul.mubr.f32.gmra.mrb[0].mxu0 %v110
    %v212 = vpop.f32.mrb[0].mxu0
    %v213 = vadd.f32 0.0, %v212
    %v214 = vpop.f32.mrb[0].mxu0
    %215 = vmatprep.mubr.f32.mxu0 0.0
    %216 = vmatmul.mubr.f32.gmra.mrb[0].mxu0 %v111
    %v217 = vpop.f32.mrb[0].mxu0
    %v218 = vadd.f32 0.0, %v217
    %v219 = vpop.f32.mrb[0].mxu0
    %220 = vmatprep.mubr.f32.mxu0 0.0
    %221 = vmatmul.mubr.f32.gmra.mrb[0].mxu0 %v112
    %v222 = vpop.f32.mrb[0].mxu0
    %v223 = vadd.f32 0.0, %v222
    %v224 = vpop.f32.mrb[0].mxu0
    %225 = vmatprep.mubr.f32.mxu0 0.0
    %226 = vmatmul.mubr.f32.gmra.mrb[0].mxu0 %v113
    %v227 = vpop.f32.mrb[0].mxu0
    %v228 = vadd.f32 0.0, %v227
    %v229 = vpop.f32.mrb[0].mxu0
    %230 = vmatprep.mubr.f32.mxu0 0.0
    %231 = vmatmul.mubr.f32.gmra.mrb[0].mxu0 %v114
    %v232 = vpop.f32.mrb[0].mxu0
    %v233 = vadd.f32 0.0, %v232
    %v234 = vpop.f32.mrb[0].mxu0
    %235 = vmatprep.mubr.f32.mxu0 0.0
    %236 = vmatmul.mubr.f32.gmra.mrb[0].mxu0 %v115
    %v237 = vpop.f32.mrb[0].mxu0
    %v238 = vadd.f32 0.0, %v237
    %v239 = vpop.f32.mrb[0].mxu0
    %240 = vmatprep.mubr.f32.mxu0 0.0
    %241 = vmatmul.mubr.f32.gmra.mrb[0].mxu0 %v116
    %v242 = vpop.f32.mrb[0].mxu0
    %v243 = vadd.f32 0.0, %v242
    %v244 = vpop.f32.mrb[0].mxu0
    %245 = vmatprep.mubr.f32.mxu0 0.0
    %246 = vmatmul.mubr.f32.gmra.mrb[0].mxu0 %v117
    %v247 = vpop.f32.mrb[0].mxu0
    %v248 = vadd.f32 0.0, %v247
    %v249 = vpop.f32.mrb[0].mxu0
    %250 = vmatprep.mubr.f32.mxu0 0.0
    %251 = vmatmul.mubr.f32.gmra.mrb[0].mxu0 %v118
    %v252 = vpop.f32.mrb[0].mxu0
    %v253 = vadd.f32 0.0, %v252
    %v254 = vpop.f32.mrb[0].mxu0
    %255 = vmatprep.mubr.f32.mxu0 0.0
    %256 = vmatmul.mubr.f32.gmra.mrb[0].mxu0 %v119
    %v257 = vpop.f32.mrb[0].mxu0
    %v258 = vadd.f32 0.0, %v257
    %v259 = vpop.f32.mrb[0].mxu0
    %260 = vmatprep.mubr.f32.mxu0 0.0
    %261 = vmatmul.mubr.f32.gmra.mrb[0].mxu0 %v120
    %v262 = vpop.f32.mrb[0].mxu0
    %v263 = vadd.f32 0.0, %v262
    %v264 = vpop.f32.mrb[0].mxu0
    %265 = vmatprep.mubr.f32.mxu0 0.0
    %266 = vmatmul.mubr.f32.gmra.mrb[0].mxu0 %v121
    %v267 = vpop.f32.mrb[0].mxu0
    %v268 = vadd.f32 0.0, %v267
    %v269 = vpop.f32.mrb[0].mxu0
    %270 = vmatprep.mubr.f32.mxu0 0.0
    %271 = vmatmul.mubr.f32.gmra.mrb[0].mxu0 %v122
    %v272 = vpop.f32.mrb[0].mxu0
    %v273 = vadd.f32 0.0, %v272
    %v274 = vpop.f32.mrb[0].mxu0
    %275 = vmatprep.mubr.f32.mxu0 0.0
    %276 = vmatmul.mubr.f32.gmra.mrb[0].mxu0 %v123
    %v277 = vpop.f32.mrb[0].mxu0
    %v278 = vadd.f32 0.0, %v277
    %v279 = vpop.f32.mrb[0].mxu0
    %280 = vmatprep.mubr.f32.mxu0 0.0
    %281 = vmatmul.mubr.f32.gmra.mrb[0].mxu0 %v124
    %v282 = vpop.f32.mrb[0].mxu0
    %v283 = vadd.f32 0.0, %v282
    %v284 = vpop.f32.mrb[0].mxu0
    %285 = vdwg.mxu0
    %v286 = vld [vmem:[#allocation2] sm:$0xff]
    %v287 = vld [vmem:[#allocation2 + $0x8] sm:$0xff]
    %v288 = vld [vmem:[#allocation2 + $0x10] sm:$0xff]
    %v289 = vld [vmem:[#allocation2 + $0x18] sm:$0xff]
    %v290 = vld [vmem:[#allocation2 + $0x20] sm:$0xff]
    %v291 = vld [vmem:[#allocation2 + $0x28] sm:$0xff]
    %v292 = vld [vmem:[#allocation2 + $0x30] sm:$0xff]
    %v293 = vld [vmem:[#allocation2 + $0x38] sm:$0xff]
    %v294 = vld [vmem:[#allocation2 + $0x40] sm:$0xff]
    %v295 = vld [vmem:[#allocation2 + $0x48] sm:$0xff]
    %v296 = vld [vmem:[#allocation2 + $0x50] sm:$0xff]
    %v297 = vld [vmem:[#allocation2 + $0x58] sm:$0xff]
    %v298 = vld [vmem:[#allocation2 + $0x60] sm:$0xff]
    %v299 = vld [vmem:[#allocation2 + $0x68] sm:$0xff]
    %v300 = vld [vmem:[#allocation2 + $0x70] sm:$0xff]
    %v301 = vld [vmem:[#allocation2 + $0x78] sm:$0xff]
    %v302 = vld [vmem:[#allocation6] sm:$0xff]
    %v303 = vld [vmem:[#allocation6 + $0x8] sm:$0xff]
    %v304 = vld [vmem:[#allocation6 + $0x10] sm:$0xff]
    %v305 = vld [vmem:[#allocation6 + $0x18] sm:$0xff]
    %v306 = vld [vmem:[#allocation6 + $0x20] sm:$0xff]
    %v307 = vld [vmem:[#allocation6 + $0x28] sm:$0xff]
    %v308 = vld [vmem:[#allocation6 + $0x30] sm:$0xff]
    %v309 = vld [vmem:[#allocation6 + $0x38] sm:$0xff]
    %v310 = vld [vmem:[#allocation6 + $0x40] sm:$0xff]
    %v311 = vld [vmem:[#allocation6 + $0x48] sm:$0xff]
    %v312 = vld [vmem:[#allocation6 + $0x50] sm:$0xff]
    %v313 = vld [vmem:[#allocation6 + $0x58] sm:$0xff]
    %v314 = vld [vmem:[#allocation6 + $0x60] sm:$0xff]
    %v315 = vld [vmem:[#allocation6 + $0x68] sm:$0xff]
    %v316 = vld [vmem:[#allocation6 + $0x70] sm:$0xff]
    %v317 = vld [vmem:[#allocation6 + $0x78] sm:$0xff]
    %318 = vxpose.xlu0.b32.start [1/16] %v302, 128
    %319 = vxpose.xlu0.b32.cont [2/16] %v303, 128
    %320 = vxpose.xlu0.b32.cont [3/16] %v304, 128
    %321 = vxpose.xlu0.b32.cont [4/16] %v305, 128
    %322 = vxpose.xlu0.b32.cont [5/16] %v306, 128
    %323 = vxpose.xlu0.b32.cont [6/16] %v307, 128
    %324 = vxpose.xlu0.b32.cont [7/16] %v308, 128
    %325 = vxpose.xlu0.b32.cont [8/16] %v309, 128
    %326 = vxpose.xlu0.b32.cont [9/16] %v310, 128
    %327 = vxpose.xlu0.b32.cont [10/16] %v311, 128
    %328 = vxpose.xlu0.b32.cont [11/16] %v312, 128
    %329 = vxpose.xlu0.b32.cont [12/16] %v313, 128
    %330 = vxpose.xlu0.b32.cont [13/16] %v314, 128
    %331 = vxpose.xlu0.b32.cont [14/16] %v315, 128
    %332 = vxpose.xlu0.b32.cont [15/16] %v316, 128
    %333 = vxpose.xlu0.b32.end [16/16] %v317, 128
    %v334 = vpop.trf.xlu0
    %v335 = vpop.trf.xlu0
    %v336 = vpop.trf.xlu0
    %v337 = vpop.trf.xlu0
    %v338 = vpop.trf.xlu0
    %v339 = vpop.trf.xlu0
    %v340 = vpop.trf.xlu0
    %v341 = vpop.trf.xlu0
    %v342 = vpop.trf.xlu0
    %v343 = vpop.trf.xlu0
    %v344 = vpop.trf.xlu0
    %v345 = vpop.trf.xlu0
    %v346 = vpop.trf.xlu0
    %v347 = vpop.trf.xlu0
    %v348 = vpop.trf.xlu0
    %v349 = vpop.trf.xlu0
    %350 = vmatprep.subr.mxu0 0.0
    %351 = vmatpush1.msra.mxu0 %v208
    %352 = vmatprep.subr.mxu0 0.0
    %353 = vmatpush1.msra.mxu0 %v213
    %354 = vmatprep.subr.mxu0 0.0
    %355 = vmatpush1.msra.mxu0 %v218
    %356 = vmatprep.subr.mxu0 0.0
    %357 = vmatpush1.msra.mxu0 %v223
    %358 = vmatprep.subr.mxu0 0.0
    %359 = vmatpush1.msra.mxu0 %v228
    %360 = vmatprep.subr.mxu0 0.0
    %361 = vmatpush1.msra.mxu0 %v233
    %362 = vmatprep.subr.mxu0 0.0
    %363 = vmatpush1.msra.mxu0 %v238
    %364 = vmatprep.subr.mxu0 0.0
    %365 = vmatpush1.msra.mxu0 %v243
    %366 = vmatprep.subr.mxu0 0.0
    %367 = vmatpush1.msra.mxu0 %v248
    %368 = vmatprep.subr.mxu0 0.0
    %369 = vmatpush1.msra.mxu0 %v253
    %370 = vmatprep.subr.mxu0 0.0
    %371 = vmatpush1.msra.mxu0 %v258
    %372 = vmatprep.subr.mxu0 0.0
    %373 = vmatpush1.msra.mxu0 %v263
    %374 = vmatprep.subr.mxu0 0.0
    %375 = vmatpush1.msra.mxu0 %v268
    %376 = vmatprep.subr.mxu0 0.0
    %377 = vmatpush1.msra.mxu0 %v273
    %378 = vmatprep.subr.mxu0 0.0
    %379 = vmatpush1.msra.mxu0 %v278
    %380 = vmatprep.subr.mxu0 0.0
    %381 = vmatpush1.msra.mxu0 %v283
    %382 = vmatprep.subr.mxu0 0.0
    %383 = vmatpush1.msra.mxu0 0.0
    %384 = vmatprep.subr.mxu0 0.0
    %385 = vmatpush1.msra.mxu0 0.0
    %386 = vmatprep.subr.mxu0 0.0
    %387 = vmatpush1.msra.mxu0 0.0
    %388 = vmatprep.subr.mxu0 0.0
    %389 = vmatpush1.msra.mxu0 0.0
    %390 = vmatprep.subr.mxu0 0.0
    %391 = vmatpush1.msra.mxu0 0.0
    %392 = vmatprep.subr.mxu0 0.0
    %393 = vmatpush1.msra.mxu0 0.0
    %394 = vmatprep.subr.mxu0 0.0
    %395 = vmatpush1.msra.mxu0 0.0
    %396 = vmatprep.subr.mxu0 0.0
    %397 = vmatpush1.msra.mxu0 0.0
    %398 = vmatprep.subr.mxu0 0.0
    %399 = vmatpush1.msra.mxu0 0.0
    %400 = vmatprep.subr.mxu0 0.0
    %401 = vmatpush1.msra.mxu0 0.0
    %402 = vmatprep.subr.mxu0 0.0
    %403 = vmatpush1.msra.mxu0 0.0
    %404 = vmatprep.subr.mxu0 0.0
    %405 = vmatpush1.msra.mxu0 0.0
    %406 = vmatprep.subr.mxu0 0.0
    %407 = vmatpush1.msra.mxu0 0.0
    %408 = vmatprep.subr.mxu0 0.0
    %409 = vmatpush1.msra.mxu0 0.0
    %410 = vmatprep.subr.mxu0 0.0
    %411 = vmatpush1.msra.mxu0 0.0
    %412 = vmatprep.subr.mxu0 0.0
    %413 = vmatpush1.msra.mxu0 0.0
    %414 = vmatprep.mubr.f32.mxu0 0.0
    %415 = vmatmul.mubr.f32.gmra.mrb[0].mxu0 %v334
    %v416 = vpop.f32.mrb[0].mxu0
    %v417 = vadd.f32 0.0, %v416
    %v418 = vpop.f32.mrb[0].mxu0
    %419 = vmatprep.mubr.f32.mxu0 0.0
    %420 = vmatmul.mubr.f32.gmra.mrb[0].mxu0 %v335
    %v421 = vpop.f32.mrb[0].mxu0
    %v422 = vadd.f32 0.0, %v421
    %v423 = vpop.f32.mrb[0].mxu0
    %424 = vmatprep.mubr.f32.mxu0 0.0
    %425 = vmatmul.mubr.f32.gmra.mrb[0].mxu0 %v336
    %v426 = vpop.f32.mrb[0].mxu0
    %v427 = vadd.f32 0.0, %v426
    %v428 = vpop.f32.mrb[0].mxu0
    %429 = vmatprep.mubr.f32.mxu0 0.0
    %430 = vmatmul.mubr.f32.gmra.mrb[0].mxu0 %v337
    %v431 = vpop.f32.mrb[0].mxu0
    %v432 = vadd.f32 0.0, %v431
    %v433 = vpop.f32.mrb[0].mxu0
    %434 = vmatprep.mubr.f32.mxu0 0.0
    %435 = vmatmul.mubr.f32.gmra.mrb[0].mxu0 %v338
    %v436 = vpop.f32.mrb[0].mxu0
    %v437 = vadd.f32 0.0, %v436
    %v438 = vpop.f32.mrb[0].mxu0
    %439 = vmatprep.mubr.f32.mxu0 0.0
    %440 = vmatmul.mubr.f32.gmra.mrb[0].mxu0 %v339
    %v441 = vpop.f32.mrb[0].mxu0
    %v442 = vadd.f32 0.0, %v441
    %v443 = vpop.f32.mrb[0].mxu0
    %444 = vmatprep.mubr.f32.mxu0 0.0
    %445 = vmatmul.mubr.f32.gmra.mrb[0].mxu0 %v340
    %v446 = vpop.f32.mrb[0].mxu0
    %v447 = vadd.f32 0.0, %v446
    %v448 = vpop.f32.mrb[0].mxu0
    %449 = vmatprep.mubr.f32.mxu0 0.0
    %450 = vmatmul.mubr.f32.gmra.mrb[0].mxu0 %v341
    %v451 = vpop.f32.mrb[0].mxu0
    %v452 = vadd.f32 0.0, %v451
    %v453 = vpop.f32.mrb[0].mxu0
    %454 = vmatprep.mubr.f32.mxu0 0.0
    %455 = vmatmul.mubr.f32.gmra.mrb[0].mxu0 %v342
    %v456 = vpop.f32.mrb[0].mxu0
    %v457 = vadd.f32 0.0, %v456
    %v458 = vpop.f32.mrb[0].mxu0
    %459 = vmatprep.mubr.f32.mxu0 0.0
    %460 = vmatmul.mubr.f32.gmra.mrb[0].mxu0 %v343
    %v461 = vpop.f32.mrb[0].mxu0
    %v462 = vadd.f32 0.0, %v461
    %v463 = vpop.f32.mrb[0].mxu0
    %464 = vmatprep.mubr.f32.mxu0 0.0
    %465 = vmatmul.mubr.f32.gmra.mrb[0].mxu0 %v344
    %v466 = vpop.f32.mrb[0].mxu0
    %v467 = vadd.f32 0.0, %v466
    %v468 = vpop.f32.mrb[0].mxu0
    %469 = vmatprep.mubr.f32.mxu0 0.0
    %470 = vmatmul.mubr.f32.gmra.mrb[0].mxu0 %v345
    %v471 = vpop.f32.mrb[0].mxu0
    %v472 = vadd.f32 0.0, %v471
    %v473 = vpop.f32.mrb[0].mxu0
    %474 = vmatprep.mubr.f32.mxu0 0.0
    %475 = vmatmul.mubr.f32.gmra.mrb[0].mxu0 %v346
    %v476 = vpop.f32.mrb[0].mxu0
    %v477 = vadd.f32 0.0, %v476
    %v478 = vpop.f32.mrb[0].mxu0
    %479 = vmatprep.mubr.f32.mxu0 0.0
    %480 = vmatmul.mubr.f32.gmra.mrb[0].mxu0 %v347
    %v481 = vpop.f32.mrb[0].mxu0
    %v482 = vadd.f32 0.0, %v481
    %v483 = vpop.f32.mrb[0].mxu0
    %484 = vmatprep.mubr.f32.mxu0 0.0
    %485 = vmatmul.mubr.f32.gmra.mrb[0].mxu0 %v348
    %v486 = vpop.f32.mrb[0].mxu0
    %v487 = vadd.f32 0.0, %v486
    %v488 = vpop.f32.mrb[0].mxu0
    %489 = vmatprep.mubr.f32.mxu0 0.0
    %490 = vmatmul.mubr.f32.gmra.mrb[0].mxu0 %v349
    %v491 = vpop.f32.mrb[0].mxu0
    %v492 = vadd.f32 0.0, %v491
    %v493 = vpop.f32.mrb[0].mxu0
    %494 = vdwg.mxu0
    %v495 = vadd.f32 %v286, %v417
    %v496 = vadd.f32 %v287, %v422
    %v497 = vadd.f32 %v288, %v427
    %v498 = vadd.f32 %v289, %v432
    %v499 = vadd.f32 %v290, %v437
    %v500 = vadd.f32 %v291, %v442
    %v501 = vadd.f32 %v292, %v447
    %v502 = vadd.f32 %v293, %v452
    %v503 = vadd.f32 %v294, %v457
    %v504 = vadd.f32 %v295, %v462
    %v505 = vadd.f32 %v296, %v467
    %v506 = vadd.f32 %v297, %v472
    %v507 = vadd.f32 %v298, %v477
    %v508 = vadd.f32 %v299, %v482
    %v509 = vadd.f32 %v300, %v487
    %v510 = vadd.f32 %v301, %v492
    %511 = vst [vmem:[#allocation2] sm:$0xff] %v495
    %512 = vst [vmem:[#allocation2 + $0x8] sm:$0xff] %v496
    %513 = vst [vmem:[#allocation2 + $0x10] sm:$0xff] %v497
    %514 = vst [vmem:[#allocation2 + $0x18] sm:$0xff] %v498
    %515 = vst [vmem:[#allocation2 + $0x20] sm:$0xff] %v499
    %516 = vst [vmem:[#allocation2 + $0x28] sm:$0xff] %v500
    %517 = vst [vmem:[#allocation2 + $0x30] sm:$0xff] %v501
    %518 = vst [vmem:[#allocation2 + $0x38] sm:$0xff] %v502
    %519 = vst [vmem:[#allocation2 + $0x40] sm:$0xff] %v503
    %520 = vst [vmem:[#allocation2 + $0x48] sm:$0xff] %v504
    %521 = vst [vmem:[#allocation2 + $0x50] sm:$0xff] %v505
    %522 = vst [vmem:[#allocation2 + $0x58] sm:$0xff] %v506
    %523 = vst [vmem:[#allocation2 + $0x60] sm:$0xff] %v507
    %524 = vst [vmem:[#allocation2 + $0x68] sm:$0xff] %v508
    %525 = vst [vmem:[#allocation2 + $0x70] sm:$0xff] %v509
    %526 = vst [vmem:[#allocation2 + $0x78] sm:$0xff] %v510
    // Predicated region
    $region46: #{tpu_custom_call.1} parent=1 // pred_check
      %p527 = pneg %p89
    $region47: #{tpu_custom_call.1} parent=1 // pred_check_branch
      %529 = sbr.rel (%p527) target = $region49
    $region48: #{tpu_custom_call.1} parent=1 // pred_region
      %v530 = vld [vmem:[#allocation2] sm:$0xff]
      %v531 = vld [vmem:[#allocation2 + $0x8] sm:$0xff]
      %v532 = vld [vmem:[#allocation2 + $0x10] sm:$0xff]
      %v533 = vld [vmem:[#allocation2 + $0x18] sm:$0xff]
      %v534 = vld [vmem:[#allocation2 + $0x20] sm:$0xff]
      %v535 = vld [vmem:[#allocation2 + $0x28] sm:$0xff]
      %v536 = vld [vmem:[#allocation2 + $0x30] sm:$0xff]
      %v537 = vld [vmem:[#allocation2 + $0x38] sm:$0xff]
      %v538 = vld [vmem:[#allocation2 + $0x40] sm:$0xff]
      %v539 = vld [vmem:[#allocation2 + $0x48] sm:$0xff]
      %v540 = vld [vmem:[#allocation2 + $0x50] sm:$0xff]
      %v541 = vld [vmem:[#allocation2 + $0x58] sm:$0xff]
      %v542 = vld [vmem:[#allocation2 + $0x60] sm:$0xff]
      %v543 = vld [vmem:[#allocation2 + $0x68] sm:$0xff]
      %v544 = vld [vmem:[#allocation2 + $0x70] sm:$0xff]
      %v545 = vld [vmem:[#allocation2 + $0x78] sm:$0xff]
      %v546 = vmax.f32 %v530, 0.0
      %v547 = vmax.f32 %v531, 0.0
      %v548 = vmax.f32 %v532, 0.0
      %v549 = vmax.f32 %v533, 0.0
      %v550 = vmax.f32 %v534, 0.0
      %v551 = vmax.f32 %v535, 0.0
      %v552 = vmax.f32 %v536, 0.0
      %v553 = vmax.f32 %v537, 0.0
      %v554 = vmax.f32 %v538, 0.0
      %v555 = vmax.f32 %v539, 0.0
      %v556 = vmax.f32 %v540, 0.0
      %v557 = vmax.f32 %v541, 0.0
      %v558 = vmax.f32 %v542, 0.0
      %v559 = vmax.f32 %v543, 0.0
      %v560 = vmax.f32 %v544, 0.0
      %v561 = vmax.f32 %v545, 0.0
      %v562 = vld [vmem:[#allocation8] sm:$0xff]
      %v563 = vld [vmem:[#allocation8 + $0x8] sm:$0xff]
      %564 = vmatprep.subr.mxu0 0.0
      %565 = vmatpush1.msra.mxu0 %v546
      %566 = vmatprep.subr.mxu0 0.0
      %567 = vmatpush1.msra.mxu0 %v547
      %568 = vmatprep.subr.mxu0 0.0
      %569 = vmatpush1.msra.mxu0 %v548
      %570 = vmatprep.subr.mxu0 0.0
      %571 = vmatpush1.msra.mxu0 %v549
      %572 = vmatprep.subr.mxu0 0.0
      %573 = vmatpush1.msra.mxu0 %v550
      %574 = vmatprep.subr.mxu0 0.0
      %575 = vmatpush1.msra.mxu0 %v551
      %576 = vmatprep.subr.mxu0 0.0
      %577 = vmatpush1.msra.mxu0 %v552
      %578 = vmatprep.subr.mxu0 0.0
      %579 = vmatpush1.msra.mxu0 %v553
      %580 = vmatprep.subr.mxu0 0.0
      %581 = vmatpush1.msra.mxu0 %v554
      %582 = vmatprep.subr.mxu0 0.0
      %583 = vmatpush1.msra.mxu0 %v555
      %584 = vmatprep.subr.mxu0 0.0
      %585 = vmatpush1.msra.mxu0 %v556
      %586 = vmatprep.subr.mxu0 0.0
      %587 = vmatpush1.msra.mxu0 %v557
      %588 = vmatprep.subr.mxu0 0.0
      %589 = vmatpush1.msra.mxu0 %v558
      %590 = vmatprep.subr.mxu0 0.0
      %591 = vmatpush1.msra.mxu0 %v559
      %592 = vmatprep.subr.mxu0 0.0
      %593 = vmatpush1.msra.mxu0 %v560
      %594 = vmatprep.subr.mxu0 0.0
      %595 = vmatpush1.msra.mxu0 %v561
      %596 = vmatprep.subr.mxu0 0.0
      %597 = vmatpush1.msra.mxu0 0.0
      %598 = vmatprep.subr.mxu0 0.0
      %599 = vmatpush1.msra.mxu0 0.0
      %600 = vmatprep.subr.mxu0 0.0
      %601 = vmatpush1.msra.mxu0 0.0
      %602 = vmatprep.subr.mxu0 0.0
      %603 = vmatpush1.msra.mxu0 0.0
      %604 = vmatprep.subr.mxu0 0.0
      %605 = vmatpush1.msra.mxu0 0.0
      %606 = vmatprep.subr.mxu0 0.0
      %607 = vmatpush1.msra.mxu0 0.0
      %608 = vmatprep.subr.mxu0 0.0
      %609 = vmatpush1.msra.mxu0 0.0
      %610 = vmatprep.subr.mxu0 0.0
      %611 = vmatpush1.msra.mxu0 0.0
      %612 = vmatprep.subr.mxu0 0.0
      %613 = vmatpush1.msra.mxu0 0.0
      %614 = vmatprep.subr.mxu0 0.0
      %615 = vmatpush1.msra.mxu0 0.0
      %616 = vmatprep.subr.mxu0 0.0
      %617 = vmatpush1.msra.mxu0 0.0
      %618 = vmatprep.subr.mxu0 0.0
      %619 = vmatpush1.msra.mxu0 0.0
      %620 = vmatprep.subr.mxu0 0.0
      %621 = vmatpush1.msra.mxu0 0.0
      %622 = vmatprep.subr.mxu0 0.0
      %623 = vmatpush1.msra.mxu0 0.0
      %624 = vmatprep.subr.mxu0 0.0
      %625 = vmatpush1.msra.mxu0 0.0
      %626 = vmatprep.subr.mxu0 0.0
      %627 = vmatpush1.msra.mxu0 0.0
      %628 = vmatprep.mubr.f32.mxu0 0.0
      %629 = vmatmul.mubr.f32.gmra.mrb[0].mxu0 %v562
      %v630 = vpop.f32.mrb[0].mxu0
      %v631 = vadd.f32 0.0, %v630
      %v632 = vpop.f32.mrb[0].mxu0
      %633 = vmatprep.mubr.f32.mxu0 0.0
      %634 = vmatmul.mubr.f32.gmra.mrb[0].mxu0 %v563
      %v635 = vpop.f32.mrb[0].mxu0
      %v636 = vadd.f32 0.0, %v635
      %v637 = vpop.f32.mrb[0].mxu0
      %638 = vdwg.mxu0
      %v639 = vld [vmem:[#allocation11] sm:$0xff]
      %v640 = vld [vmem:[#allocation11 + $0x8] sm:$0xff]
      %v641 = vld [vmem:[#allocation11 + $0x10] sm:$0xff]
      %v642 = vld [vmem:[#allocation11 + $0x18] sm:$0xff]
      %v643 = vld [vmem:[#allocation11 + $0x20] sm:$0xff]
      %v644 = vld [vmem:[#allocation11 + $0x28] sm:$0xff]
      %v645 = vld [vmem:[#allocation11 + $0x30] sm:$0xff]
      %v646 = vld [vmem:[#allocation11 + $0x38] sm:$0xff]
      %v647 = vld [vmem:[#allocation11 + $0x40] sm:$0xff]
      %v648 = vld [vmem:[#allocation11 + $0x48] sm:$0xff]
      %v649 = vld [vmem:[#allocation11 + $0x50] sm:$0xff]
      %v650 = vld [vmem:[#allocation11 + $0x58] sm:$0xff]
      %v651 = vld [vmem:[#allocation11 + $0x60] sm:$0xff]
      %v652 = vld [vmem:[#allocation11 + $0x68] sm:$0xff]
      %v653 = vld [vmem:[#allocation11 + $0x70] sm:$0xff]
      %v654 = vld [vmem:[#allocation11 + $0x78] sm:$0xff]
      %655 = vmatprep.subr.mxu0 0.0
      %656 = vmatpush1.msra.mxu0 %v639
      %657 = vmatprep.subr.mxu0 0.0
      %658 = vmatpush1.msra.mxu0 %v640
      %659 = vmatprep.subr.mxu0 0.0
      %660 = vmatpush1.msra.mxu0 %v641
      %661 = vmatprep.subr.mxu0 0.0
      %662 = vmatpush1.msra.mxu0 %v642
      %663 = vmatprep.subr.mxu0 0.0
      %664 = vmatpush1.msra.mxu0 %v643
      %665 = vmatprep.subr.mxu0 0.0
      %666 = vmatpush1.msra.mxu0 %v644
      %667 = vmatprep.subr.mxu0 0.0
      %668 = vmatpush1.msra.mxu0 %v645
      %669 = vmatprep.subr.mxu0 0.0
      %670 = vmatpush1.msra.mxu0 %v646
      %671 = vmatprep.subr.mxu0 0.0
      %672 = vmatpush1.msra.mxu0 %v647
      %673 = vmatprep.subr.mxu0 0.0
      %674 = vmatpush1.msra.mxu0 %v648
      %675 = vmatprep.subr.mxu0 0.0
      %676 = vmatpush1.msra.mxu0 %v649
      %677 = vmatprep.subr.mxu0 0.0
      %678 = vmatpush1.msra.mxu0 %v650
      %679 = vmatprep.subr.mxu0 0.0
      %680 = vmatpush1.msra.mxu0 %v651
      %681 = vmatprep.subr.mxu0 0.0
      %682 = vmatpush1.msra.mxu0 %v652
      %683 = vmatprep.subr.mxu0 0.0
      %684 = vmatpush1.msra.mxu0 %v653
      %685 = vmatprep.subr.mxu0 0.0
      %686 = vmatpush1.msra.mxu0 %v654
      %687 = vmatprep.subr.mxu0 0.0
      %688 = vmatpush1.msra.mxu0 0.0
      %689 = vmatprep.subr.mxu0 0.0
      %690 = vmatpush1.msra.mxu0 0.0
      %691 = vmatprep.subr.mxu0 0.0
      %692 = vmatpush1.msra.mxu0 0.0
      %693 = vmatprep.subr.mxu0 0.0
      %694 = vmatpush1.msra.mxu0 0.0
      %695 = vmatprep.subr.mxu0 0.0
      %696 = vmatpush1.msra.mxu0 0.0
      %697 = vmatprep.subr.mxu0 0.0
      %698 = vmatpush1.msra.mxu0 0.0
      %699 = vmatprep.subr.mxu0 0.0
      %700 = vmatpush1.msra.mxu0 0.0
      %701 = vmatprep.subr.mxu0 0.0
      %702 = vmatpush1.msra.mxu0 0.0
      %703 = vmatprep.subr.mxu0 0.0
      %704 = vmatpush1.msra.mxu0 0.0
      %705 = vmatprep.subr.mxu0 0.0
      %706 = vmatpush1.msra.mxu0 0.0
      %707 = vmatprep.subr.mxu0 0.0
      %708 = vmatpush1.msra.mxu0 0.0
      %709 = vmatprep.subr.mxu0 0.0
      %710 = vmatpush1.msra.mxu0 0.0
      %711 = vmatprep.subr.mxu0 0.0
      %712 = vmatpush1.msra.mxu0 0.0
      %713 = vmatprep.subr.mxu0 0.0
      %714 = vmatpush1.msra.mxu0 0.0
      %715 = vmatprep.subr.mxu0 0.0
      %716 = vmatpush1.msra.mxu0 0.0
      %717 = vmatprep.subr.mxu0 0.0
      %718 = vmatpush1.msra.mxu0 0.0
      %719 = vmatprep.mubr.f32.mxu0 0.0
      %720 = vmatmul.mubr.f32.gmra.mrb[0].mxu0 %v631
      %v721 = vpop.f32.mrb[0].mxu0
      %v722 = vadd.f32 0.0, %v721
      %v723 = vpop.f32.mrb[0].mxu0
      %724 = vmatprep.mubr.f32.mxu0 0.0
      %725 = vmatmul.mubr.f32.gmra.mrb[0].mxu0 %v636
      %v726 = vpop.f32.mrb[0].mxu0
      %v727 = vadd.f32 0.0, %v726
      %v728 = vpop.f32.mrb[0].mxu0
      %729 = vdwg.mxu0
      %v730 = vlaneseq
      %v731 = vand.u32 %v730, 127
      %vm732 = vcmp.lt.s32.totalorder %v731, 8
      %v733 = vsel %vm732, %v722, -1.7014117e+38
      %v734 = vsel %vm732, %v727, -1.7014117e+38
      %735 = vmax.xlane.f32.xlu0 %v733
      %v736 = vpop.xlane.xlu0 %735
      %737 = vmax.xlane.f32.xlu0 %v734
      %v738 = vpop.xlane.xlu0 %737
      %v739 = vsub.f32 %v733, %v736
      %v740 = vsub.f32 %v734, %v738
      %v741 = vmul.f32 %v739, 1.442695
      %v742 = vpow.pop %v741
      %v743 = vmul.f32 %v740, 1.442695
      %v744 = vpow.pop %v743
      %745 = vadd.xlane.f32.xlu0 %v742
      %v746 = vpop.xlane.xlu0 %745
      %747 = vadd.xlane.f32.xlu0 %v744
      %v748 = vpop.xlane.xlu0 %747
      %v749 = vlog2.pop %v746
      %v750 = vmul.f32 %v749, 0.6931472
      %v751 = vlog2.pop %v748
      %v752 = vmul.f32 %v751, 0.6931472
      %v753 = vsub.f32 %v739, %v750
      %v754 = vsub.f32 %v740, %v752
      %755 = vst [vmem:[#allocation12] sm:$0xff] %v753
      %756 = vst [vmem:[#allocation12 + $0x8] sm:$0xff] %v754
    $region49: #{tpu_custom_call.1} parent=1 // pred_fallthru
      _
    // Predicated region
    $region50: #{tpu_custom_call.1} parent=1 // pred_check
      _
    $region51: #{tpu_custom_call.1} parent=1 // pred_check_branch
      %758 = sbr.rel (0) target = $region53
    $region52: #{tpu_custom_call.1} parent=1 // pred_region
      %s760 = ssub.s32 256, 256
      %761 = vsyncadd [#allocation5], %s760
      %s762 = sshll.u32 [#allocation12], 4
      %s763 = int_to_ptr.vmem [resolvable:$true] %s762
      %768 = dma.vmem_to_hbm [thread:$0]  %s763, 256, %s5, [#allocation5], 128, 128, 8
    $region53: #{tpu_custom_call.1} parent=1 // pred_fallthru
      _
    // Predicated region
    $region54: #{tpu_custom_call.1} parent=1 // pred_check
      _
    $region55: #{tpu_custom_call.1} parent=1 // pred_check_branch
      %770 = sbr.rel (0) target = $region57
    $region56: #{tpu_custom_call.1} parent=1 // pred_region
      %771 = dma.done [#allocation5], 256
    $region57: #{tpu_custom_call.1} parent=1 // pred_fallthru
      _
    %772 = vsyncpa [#allocation4], 1
    %773 = vsyncpa [#allocation7], 1
    %774 = vsyncpa [#allocation10], 1
    %775 = vsyncpa [#allocation5], 1

</llo_original>
